<compile_context>
chip_gen: v6e
topology: v6e:2x2x1
jax: 0.10.0
libtpu: 0.0.40
codegen_flags: <defaults>
</compile_context>

<pallas_src>
import jax
import jax.numpy as jnp
from jax import lax
from jax.experimental import pallas as pl
from jax.experimental.pallas import tpu as pltpu

# ---- model / problem sizes (small but tile-aligned) ----
B = 8            # batch
SENT = 768       # BERT sentence embedding dim
RANK = 128       # tkbc rank
D = 2 * RANK     # tkbc embedding dim (= 256)
NE = 256         # num entities
NT = 128         # num times
EPS = 1e-5       # BatchNorm eps
TB = 8           # batch rows per grid step (== B here)


def qa_scores_kernel(heads_ref, tails_ref, times_ref,        # scalar prefetch (SMEM)
                     q_ref, wl_ref, bl_ref,
                     w1_ref, sh1_ref, w2_ref, sh2_ref,
                     full_ref, entT_ref, timeT_ref,
                     out_ref):
    """Linear -> (Linear+BN folded) x2 -> TComplEx scoring, with in-kernel
    embedding-row gather and merged K=256 scoring matmuls."""
    tb = q_ref.shape[0]
    base = pl.program_id(0) * tb

    # ---------------- relation MLP ----------------
    q = q_ref[...].astype(jnp.bfloat16)
    rel = jnp.dot(q, wl_ref[...],
                  preferred_element_type=jnp.float32) + bl_ref[...]        # (tb, D) f32
    rel_b = rel.astype(jnp.bfloat16)
    # BN scale folded into the weight columns; shift absorbs bias + BN shift.
    r1 = jnp.dot(rel_b, w1_ref[...],
                 preferred_element_type=jnp.float32) + sh1_ref[...]        # (tb, D)
    r2 = jnp.dot(rel_b, w2_ref[...],
                 preferred_element_type=jnp.float32) + sh2_ref[...]        # (tb, D)

    # -------- in-kernel gather of head/tail/time rows from fused table --------
    def gather(idx_ref):
        rows = [full_ref[pl.ds(idx_ref[base + j], 1), :] for j in range(tb)]
        return jnp.concatenate(rows, axis=0)                               # (tb, D) f32

    head = gather(heads_ref)
    tail = gather(tails_ref)
    temb = gather(times_ref)

    l0, l1 = head[:, :RANK], head[:, RANK:]
    rh0, rh1 = tail[:, :RANK], tail[:, RANK:]

    # shared head*tail products, computed once (f32 on the VPU)
    l0rh0 = l0 * rh0
    l1rh1 = l1 * rh1
    l1rh0 = l1 * rh0
    l0rh1 = l0 * rh1

    # ------------- score_time : [At | Bt] @ time_table^T (one K=256 dot) -------------
    a0, a1 = r1[:, :RANK], r1[:, RANK:]
    At = a0 * (l0rh0 - l1rh1) + a1 * (l0rh1 - l1rh0)
    Bt = a0 * (l1rh0 + l0rh1) - a1 * (l0rh0 + l1rh1)
    ab_t = jnp.concatenate([At, Bt], axis=1).astype(jnp.bfloat16)          # (tb, D)
    scores_time = jnp.dot(ab_t, timeT_ref[...],
                          preferred_element_type=jnp.float32)              # (tb, NT)

    # ------------ score_entity : [Ae | Be] @ ent_table^T (one K=256 dot) -------------
    c0, c1 = r2[:, :RANK], r2[:, RANK:]
    t0, t1 = temb[:, :RANK], temb[:, RANK:]
    full0 = c0 * t0 - c1 * t1
    full1 = c1 * t0 + c0 * t1
    Ae = l0 * full0 - l1 * full1
    Be = l1 * full0 + l0 * full1
    ab_e = jnp.concatenate([Ae, Be], axis=1).astype(jnp.bfloat16)          # (tb, D)
    scores_ent = jnp.dot(ab_e, entT_ref[...],
                         preferred_element_type=jnp.float32)               # (tb, NE)

    # scores = cat((scores_entity, scores_time), dim=1); both writes lane-aligned
    out_ref[:, :NE] = scores_ent
    out_ref[:, NE:] = scores_time


def prepare_params(params):
    """One-time prep: transpose weights, fold BN, cast big operands to bf16,
    build the fused entity+time table.  Not part of the per-call path."""
    s1 = params["bn1_gamma"] / jnp.sqrt(params["bn1_var"] + EPS)
    t1 = params["bn1_beta"] - params["bn1_mean"] * s1
    s2 = params["bn2_gamma"] / jnp.sqrt(params["bn2_var"] + EPS)
    t2 = params["bn2_beta"] - params["bn2_mean"] * s2
    full = jnp.concatenate([params["ent_emb"], params["time_emb"]], axis=0)
    prep = {
        "Wl_T":  params["Wl"].T.astype(jnp.bfloat16),                      # (SENT, D)
        "bl":    params["bl"][None, :].astype(jnp.float32),                # (1, D)
        "W1s":   (params["W1"].T * s1[None, :]).astype(jnp.bfloat16),      # (D, D)
        "sh1":   (params["b1"] * s1 + t1)[None, :].astype(jnp.float32),    # (1, D)
        "W2s":   (params["W2"].T * s2[None, :]).astype(jnp.bfloat16),      # (D, D)
        "sh2":   (params["b2"] * s2 + t2)[None, :].astype(jnp.float32),    # (1, D)
        "full_table": full.astype(jnp.float32),                            # (NE+NT, D)
        "ent_T":  params["ent_emb"].T.astype(jnp.bfloat16),                # (D, NE)
        "time_T": params["time_emb"].T.astype(jnp.bfloat16),               # (D, NT)
    }
    return jax.tree_util.tree_map(jax.device_put, prep)


@jax.jit
def qa_baseline_forward(q_emb, heads, tails, times, prep):
    b = q_emb.shape[0]
    assert b % TB == 0
    grid = (b // TB,)
    const = lambda i, *_: (0, 0)        # weights/tables resident across batch tiles

    call = pl.pallas_call(
        qa_scores_kernel,
        out_shape=jax.ShapeDtypeStruct((b, NE + NT), jnp.float32),
        grid_spec=pltpu.PrefetchScalarGridSpec(
            num_scalar_prefetch=3,                 # heads, tails, times -> SMEM
            grid=grid,
            in_specs=[
                pl.BlockSpec((TB, SENT), lambda i, *_: (i, 0)),   # q_emb
                pl.BlockSpec((SENT, D), const),                   # Wl^T (bf16)
                pl.BlockSpec((1, D), const),                      # bl
                pl.BlockSpec((D, D), const),                      # W1^T * s1 (bf16)
                pl.BlockSpec((1, D), const),                      # b1*s1 + t1
                pl.BlockSpec((D, D), const),                      # W2^T * s2 (bf16)
                pl.BlockSpec((1, D), const),                      # b2*s2 + t2
                pl.BlockSpec((NE + NT, D), const),                # fused ent+time table (f32)
                pl.BlockSpec((D, NE), const),                     # ent table^T (bf16)
                pl.BlockSpec((D, NT), const),                     # time table^T (bf16)
            ],
            out_specs=pl.BlockSpec((TB, NE + NT), lambda i, *_: (i, 0)),
        ),
        compiler_params=pltpu.CompilerParams(
            dimension_semantics=("parallel",)),     # batch tiles split across v7x TCs
    )
    return call(heads.astype(jnp.int32), tails.astype(jnp.int32),
                times.astype(jnp.int32),
                q_emb,
                prep["Wl_T"], prep["bl"],
                prep["W1s"], prep["sh1"], prep["W2s"], prep["sh2"],
                prep["full_table"], prep["ent_T"], prep["time_T"])


def qa_baseline_reference(q_emb, heads, tails, times, params):
    """Pure-JAX f32 reference mirroring the PyTorch forward (eval mode)."""
    full = jnp.concatenate([params["ent_emb"], params["time_emb"]], axis=0)
    head = full[heads]
    tail = full[tails]
    temb = full[times]

    rel = q_emb @ params["Wl"].T + params["bl"]

    def bn(x, g, b, m, v):
        return (x - m) / jnp.sqrt(v + EPS) * g + b

    r1 = bn(rel @ params["W1"].T + params["b1"],
            params["bn1_gamma"], params["bn1_beta"],
            params["bn1_mean"], params["bn1_var"])
    r2 = bn(rel @ params["W2"].T + params["b2"],
            params["bn2_gamma"], params["bn2_beta"],
            params["bn2_mean"], params["bn2_var"])

    l0, l1 = head[:, :RANK], head[:, RANK:]
    rh0, rh1 = tail[:, :RANK], tail[:, RANK:]

    a0, a1 = r1[:, :RANK], r1[:, RANK:]
    tre, tim = params["time_emb"][:, :RANK], params["time_emb"][:, RANK:]
    st = ((l0 * a0 * rh0 - l1 * a1 * rh0 - l1 * a0 * rh1 + l0 * a1 * rh1) @ tre.T
          + (l1 * a0 * rh0 - l0 * a1 * rh0 + l0 * a0 * rh1 - l1 * a1 * rh1) @ tim.T)

    c0, c1 = r2[:, :RANK], r2[:, RANK:]
    t0, t1 = temb[:, :RANK], temb[:, RANK:]
    ere, eim = params["ent_emb"][:, :RANK], params["ent_emb"][:, RANK:]
    f0 = c0 * t0 - c1 * t1
    f1 = c1 * t0 + c0 * t1
    se = (l0 * f0 - l1 * f1) @ ere.T + (l1 * f0 + l0 * f1) @ eim.T
    return jnp.concatenate([se, st], axis=1)


if __name__ == "__main__":
    key = jax.random.PRNGKey(0)
    ks = jax.random.split(key, 16)

    params = {
        "ent_emb":  jax.random.normal(ks[0], (NE, D), jnp.float32) * 0.1,
        "time_emb": jax.random.normal(ks[1], (NT, D), jnp.float32) * 0.1,
        # nn.Linear weights stored PyTorch-style as (out_features, in_features)
        "Wl": jax.random.normal(ks[2], (D, SENT), jnp.float32) * 0.05,
        "bl": jax.random.normal(ks[3], (D,), jnp.float32) * 0.05,
        "W1": jax.random.normal(ks[4], (D, D), jnp.float32) * 0.05,
        "b1": jax.random.normal(ks[5], (D,), jnp.float32) * 0.05,
        "W2": jax.random.normal(ks[6], (D, D), jnp.float32) * 0.05,
        "b2": jax.random.normal(ks[7], (D,), jnp.float32) * 0.05,
        "bn1_gamma": 1.0 + 0.1 * jax.random.normal(ks[8], (D,), jnp.float32),
        "bn1_beta":  0.1 * jax.random.normal(ks[9], (D,), jnp.float32),
        "bn1_mean":  0.1 * jax.random.normal(ks[10], (D,), jnp.float32),
        "bn1_var":   jnp.abs(1.0 + 0.1 * jax.random.normal(ks[11], (D,), jnp.float32)),
        "bn2_gamma": 1.0 + 0.1 * jax.random.normal(ks[12], (D,), jnp.float32),
        "bn2_beta":  0.1 * jax.random.normal(ks[13], (D,), jnp.float32),
        "bn2_mean":  0.1 * jax.random.normal(ks[14], (D,), jnp.float32),
        "bn2_var":   jnp.abs(1.0 + 0.1 * jax.random.normal(ks[15], (D,), jnp.float32)),
    }

    kq, kh, kt, ktm = jax.random.split(jax.random.PRNGKey(1), 4)
    q_emb = jax.random.normal(kq, (B, SENT), jnp.float32) * 0.1   # BERT CLS stand-in
    heads = jax.random.randint(kh, (B,), 0, NE)                   # entity ids
    tails = jax.random.randint(kt, (B,), 0, NE)                   # entity ids
    times = jax.random.randint(ktm, (B,), NE, NE + NT)            # time ids (offset)

    prep = prepare_params(params)                                 # one-time prep
    out = qa_baseline_forward(q_emb, heads, tails, times, prep)
    out = jax.block_until_ready(out)

    ref = qa_baseline_reference(q_emb, heads, tails, times, params)
    assert out.shape == (B, NE + NT), out.shape
    err = float(jnp.max(jnp.abs(out - ref)))
    assert jnp.allclose(out, ref, rtol=5e-2, atol=2e-3), err

    print("KERNEL_OK")
</pallas_src>

<mosaic_0001>
module attributes {stable_mosaic.version = 11 : i64} {
  func.func @qa_scores_kernel(%arg0: i32, %arg1: memref<8xi32, #tpu.memory_space<smem>>, %arg2: memref<8xi32, #tpu.memory_space<smem>>, %arg3: memref<8xi32, #tpu.memory_space<smem>>, %arg4: memref<8x768xf32, #tpu.memory_space<vmem>>, %arg5: memref<768x256xbf16, #tpu.memory_space<vmem>>, %arg6: memref<1x256xf32, #tpu.memory_space<vmem>>, %arg7: memref<256x256xbf16, #tpu.memory_space<vmem>>, %arg8: memref<1x256xf32, #tpu.memory_space<vmem>>, %arg9: memref<256x256xbf16, #tpu.memory_space<vmem>>, %arg10: memref<1x256xf32, #tpu.memory_space<vmem>>, %arg11: memref<384x256xf32, #tpu.memory_space<vmem>>, %arg12: memref<256x256xbf16, #tpu.memory_space<vmem>>, %arg13: memref<256x128xbf16, #tpu.memory_space<vmem>>, %arg14: memref<8x384xf32, #tpu.memory_space<vmem>>) attributes {dimension_semantics = [#tpu.dimension_semantics<parallel>], iteration_bounds = array<i64: 1>, scalar_prefetch = 3 : i64, scratch_operands = 0 : i64, tpu.core_type = #tpu.core_type<tc>, window_params = [{transform_indices = @transform_0, window_bounds = array<i64: 8, 768>}, {pipeline_mode = #tpu.pipeline_mode<synchronous>, transform_indices = @transform_1, window_bounds = array<i64: 768, 256>}, {pipeline_mode = #tpu.pipeline_mode<synchronous>, transform_indices = @transform_2, window_bounds = array<i64: 1, 256>}, {pipeline_mode = #tpu.pipeline_mode<synchronous>, transform_indices = @transform_3, window_bounds = array<i64: 256, 256>}, {pipeline_mode = #tpu.pipeline_mode<synchronous>, transform_indices = @transform_4, window_bounds = array<i64: 1, 256>}, {pipeline_mode = #tpu.pipeline_mode<synchronous>, transform_indices = @transform_5, window_bounds = array<i64: 256, 256>}, {pipeline_mode = #tpu.pipeline_mode<synchronous>, transform_indices = @transform_6, window_bounds = array<i64: 1, 256>}, {pipeline_mode = #tpu.pipeline_mode<synchronous>, transform_indices = @transform_7, window_bounds = array<i64: 384, 256>}, {pipeline_mode = #tpu.pipeline_mode<synchronous>, transform_indices = @transform_8, window_bounds = array<i64: 256, 256>}, {pipeline_mode = #tpu.pipeline_mode<synchronous>, transform_indices = @transform_9, window_bounds = array<i64: 256, 128>}, {transform_indices = @transform_10, window_bounds = array<i64: 8, 384>}]} {
    %c8_i32 = arith.constant 8 : i32
    %0 = arith.muli %arg0, %c8_i32 : i32
    %c0 = arith.constant 0 : index
    %c0_0 = arith.constant 0 : index
    %1 = vector.load %arg4[%c0, %c0_0] : memref<8x768xf32, #tpu.memory_space<vmem>>, vector<8x768xf32>
    %2 = arith.truncf %1 : vector<8x768xf32> to vector<8x768xbf16>
    %c0_1 = arith.constant 0 : index
    %c0_2 = arith.constant 0 : index
    %3 = vector.load %arg5[%c0_1, %c0_2] : memref<768x256xbf16, #tpu.memory_space<vmem>>, vector<768x256xbf16>
    %cst = arith.constant dense<0.000000e+00> : vector<8x256xf32>
    %4 = tpu.matmul %2, %3, %cst {dimension_numbers = #tpu.dot_dimension_numbers<[1], [0], [0], [1], [0, 0, 1, 1], [], []>} : vector<8x768xbf16>, vector<768x256xbf16>, vector<8x256xf32> -> vector<8x256xf32>
    %c0_3 = arith.constant 0 : index
    %c0_4 = arith.constant 0 : index
    %5 = vector.load %arg6[%c0_3, %c0_4] : memref<1x256xf32, #tpu.memory_space<vmem>>, vector<1x256xf32>
    %6 = vector.broadcast %5 : vector<1x256xf32> to vector<8x256xf32>
    %7 = arith.addf %4, %6 : vector<8x256xf32>
    %8 = arith.truncf %7 : vector<8x256xf32> to vector<8x256xbf16>
    %c0_5 = arith.constant 0 : index
    %c0_6 = arith.constant 0 : index
    %9 = vector.load %arg7[%c0_5, %c0_6] : memref<256x256xbf16, #tpu.memory_space<vmem>>, vector<256x256xbf16>
    %cst_7 = arith.constant dense<0.000000e+00> : vector<8x256xf32>
    %10 = tpu.matmul %8, %9, %cst_7 {dimension_numbers = #tpu.dot_dimension_numbers<[1], [0], [0], [1], [0, 0, 1, 1], [], []>} : vector<8x256xbf16>, vector<256x256xbf16>, vector<8x256xf32> -> vector<8x256xf32>
    %c0_8 = arith.constant 0 : index
    %c0_9 = arith.constant 0 : index
    %11 = vector.load %arg8[%c0_8, %c0_9] : memref<1x256xf32, #tpu.memory_space<vmem>>, vector<1x256xf32>
    %12 = vector.broadcast %11 : vector<1x256xf32> to vector<8x256xf32>
    %13 = arith.addf %10, %12 : vector<8x256xf32>
    %c0_10 = arith.constant 0 : index
    %c0_11 = arith.constant 0 : index
    %14 = vector.load %arg9[%c0_10, %c0_11] : memref<256x256xbf16, #tpu.memory_space<vmem>>, vector<256x256xbf16>
    %cst_12 = arith.constant dense<0.000000e+00> : vector<8x256xf32>
    %15 = tpu.matmul %8, %14, %cst_12 {dimension_numbers = #tpu.dot_dimension_numbers<[1], [0], [0], [1], [0, 0, 1, 1], [], []>} : vector<8x256xbf16>, vector<256x256xbf16>, vector<8x256xf32> -> vector<8x256xf32>
    %c0_13 = arith.constant 0 : index
    %c0_14 = arith.constant 0 : index
    %16 = vector.load %arg10[%c0_13, %c0_14] : memref<1x256xf32, #tpu.memory_space<vmem>>, vector<1x256xf32>
    %17 = vector.broadcast %16 : vector<1x256xf32> to vector<8x256xf32>
    %18 = arith.addf %15, %17 : vector<8x256xf32>
    %c0_i32 = arith.constant 0 : i32
    %19 = arith.addi %0, %c0_i32 : i32
    %20 = arith.index_cast %19 : i32 to index
    %21 = memref.load %arg1[%20] : memref<8xi32, #tpu.memory_space<smem>>
    %22 = arith.index_cast %21 : i32 to index
    %c0_15 = arith.constant 0 : index
    %23 = vector.load %arg11[%22, %c0_15] : memref<384x256xf32, #tpu.memory_space<vmem>>, vector<1x256xf32>
    %c1_i32 = arith.constant 1 : i32
    %24 = arith.addi %0, %c1_i32 : i32
    %25 = arith.index_cast %24 : i32 to index
    %26 = memref.load %arg1[%25] : memref<8xi32, #tpu.memory_space<smem>>
    %27 = arith.index_cast %26 : i32 to index
    %c0_16 = arith.constant 0 : index
    %28 = vector.load %arg11[%27, %c0_16] : memref<384x256xf32, #tpu.memory_space<vmem>>, vector<1x256xf32>
    %c2_i32 = arith.constant 2 : i32
    %29 = arith.addi %0, %c2_i32 : i32
    %30 = arith.index_cast %29 : i32 to index
    %31 = memref.load %arg1[%30] : memref<8xi32, #tpu.memory_space<smem>>
    %32 = arith.index_cast %31 : i32 to index
    %c0_17 = arith.constant 0 : index
    %33 = vector.load %arg11[%32, %c0_17] : memref<384x256xf32, #tpu.memory_space<vmem>>, vector<1x256xf32>
    %c3_i32 = arith.constant 3 : i32
    %34 = arith.addi %0, %c3_i32 : i32
    %35 = arith.index_cast %34 : i32 to index
    %36 = memref.load %arg1[%35] : memref<8xi32, #tpu.memory_space<smem>>
    %37 = arith.index_cast %36 : i32 to index
    %c0_18 = arith.constant 0 : index
    %38 = vector.load %arg11[%37, %c0_18] : memref<384x256xf32, #tpu.memory_space<vmem>>, vector<1x256xf32>
    %c4_i32 = arith.constant 4 : i32
    %39 = arith.addi %0, %c4_i32 : i32
    %40 = arith.index_cast %39 : i32 to index
    %41 = memref.load %arg1[%40] : memref<8xi32, #tpu.memory_space<smem>>
    %42 = arith.index_cast %41 : i32 to index
    %c0_19 = arith.constant 0 : index
    %43 = vector.load %arg11[%42, %c0_19] : memref<384x256xf32, #tpu.memory_space<vmem>>, vector<1x256xf32>
    %c5_i32 = arith.constant 5 : i32
    %44 = arith.addi %0, %c5_i32 : i32
    %45 = arith.index_cast %44 : i32 to index
    %46 = memref.load %arg1[%45] : memref<8xi32, #tpu.memory_space<smem>>
    %47 = arith.index_cast %46 : i32 to index
    %c0_20 = arith.constant 0 : index
    %48 = vector.load %arg11[%47, %c0_20] : memref<384x256xf32, #tpu.memory_space<vmem>>, vector<1x256xf32>
    %c6_i32 = arith.constant 6 : i32
    %49 = arith.addi %0, %c6_i32 : i32
    %50 = arith.index_cast %49 : i32 to index
    %51 = memref.load %arg1[%50] : memref<8xi32, #tpu.memory_space<smem>>
    %52 = arith.index_cast %51 : i32 to index
    %c0_21 = arith.constant 0 : index
    %53 = vector.load %arg11[%52, %c0_21] : memref<384x256xf32, #tpu.memory_space<vmem>>, vector<1x256xf32>
    %c7_i32 = arith.constant 7 : i32
    %54 = arith.addi %0, %c7_i32 : i32
    %55 = arith.index_cast %54 : i32 to index
    %56 = memref.load %arg1[%55] : memref<8xi32, #tpu.memory_space<smem>>
    %57 = arith.index_cast %56 : i32 to index
    %c0_22 = arith.constant 0 : index
    %58 = vector.load %arg11[%57, %c0_22] : memref<384x256xf32, #tpu.memory_space<vmem>>, vector<1x256xf32>
    %59 = tpu.concatenate %23, %28, %33, %38, %43, %48, %53, %58 in 0 : vector<1x256xf32>, vector<1x256xf32>, vector<1x256xf32>, vector<1x256xf32>, vector<1x256xf32>, vector<1x256xf32>, vector<1x256xf32>, vector<1x256xf32> -> vector<8x256xf32>
    %c0_i32_23 = arith.constant 0 : i32
    %60 = arith.addi %0, %c0_i32_23 : i32
    %61 = arith.index_cast %60 : i32 to index
    %62 = memref.load %arg2[%61] : memref<8xi32, #tpu.memory_space<smem>>
    %63 = arith.index_cast %62 : i32 to index
    %c0_24 = arith.constant 0 : index
    %64 = vector.load %arg11[%63, %c0_24] : memref<384x256xf32, #tpu.memory_space<vmem>>, vector<1x256xf32>
    %c1_i32_25 = arith.constant 1 : i32
    %65 = arith.addi %0, %c1_i32_25 : i32
    %66 = arith.index_cast %65 : i32 to index
    %67 = memref.load %arg2[%66] : memref<8xi32, #tpu.memory_space<smem>>
    %68 = arith.index_cast %67 : i32 to index
    %c0_26 = arith.constant 0 : index
    %69 = vector.load %arg11[%68, %c0_26] : memref<384x256xf32, #tpu.memory_space<vmem>>, vector<1x256xf32>
    %c2_i32_27 = arith.constant 2 : i32
    %70 = arith.addi %0, %c2_i32_27 : i32
    %71 = arith.index_cast %70 : i32 to index
    %72 = memref.load %arg2[%71] : memref<8xi32, #tpu.memory_space<smem>>
    %73 = arith.index_cast %72 : i32 to index
    %c0_28 = arith.constant 0 : index
    %74 = vector.load %arg11[%73, %c0_28] : memref<384x256xf32, #tpu.memory_space<vmem>>, vector<1x256xf32>
    %c3_i32_29 = arith.constant 3 : i32
    %75 = arith.addi %0, %c3_i32_29 : i32
    %76 = arith.index_cast %75 : i32 to index
    %77 = memref.load %arg2[%76] : memref<8xi32, #tpu.memory_space<smem>>
    %78 = arith.index_cast %77 : i32 to index
    %c0_30 = arith.constant 0 : index
    %79 = vector.load %arg11[%78, %c0_30] : memref<384x256xf32, #tpu.memory_space<vmem>>, vector<1x256xf32>
    %c4_i32_31 = arith.constant 4 : i32
    %80 = arith.addi %0, %c4_i32_31 : i32
    %81 = arith.index_cast %80 : i32 to index
    %82 = memref.load %arg2[%81] : memref<8xi32, #tpu.memory_space<smem>>
    %83 = arith.index_cast %82 : i32 to index
    %c0_32 = arith.constant 0 : index
    %84 = vector.load %arg11[%83, %c0_32] : memref<384x256xf32, #tpu.memory_space<vmem>>, vector<1x256xf32>
    %c5_i32_33 = arith.constant 5 : i32
    %85 = arith.addi %0, %c5_i32_33 : i32
    %86 = arith.index_cast %85 : i32 to index
    %87 = memref.load %arg2[%86] : memref<8xi32, #tpu.memory_space<smem>>
    %88 = arith.index_cast %87 : i32 to index
    %c0_34 = arith.constant 0 : index
    %89 = vector.load %arg11[%88, %c0_34] : memref<384x256xf32, #tpu.memory_space<vmem>>, vector<1x256xf32>
    %c6_i32_35 = arith.constant 6 : i32
    %90 = arith.addi %0, %c6_i32_35 : i32
    %91 = arith.index_cast %90 : i32 to index
    %92 = memref.load %arg2[%91] : memref<8xi32, #tpu.memory_space<smem>>
    %93 = arith.index_cast %92 : i32 to index
    %c0_36 = arith.constant 0 : index
    %94 = vector.load %arg11[%93, %c0_36] : memref<384x256xf32, #tpu.memory_space<vmem>>, vector<1x256xf32>
    %c7_i32_37 = arith.constant 7 : i32
    %95 = arith.addi %0, %c7_i32_37 : i32
    %96 = arith.index_cast %95 : i32 to index
    %97 = memref.load %arg2[%96] : memref<8xi32, #tpu.memory_space<smem>>
    %98 = arith.index_cast %97 : i32 to index
    %c0_38 = arith.constant 0 : index
    %99 = vector.load %arg11[%98, %c0_38] : memref<384x256xf32, #tpu.memory_space<vmem>>, vector<1x256xf32>
    %100 = tpu.concatenate %64, %69, %74, %79, %84, %89, %94, %99 in 0 : vector<1x256xf32>, vector<1x256xf32>, vector<1x256xf32>, vector<1x256xf32>, vector<1x256xf32>, vector<1x256xf32>, vector<1x256xf32>, vector<1x256xf32> -> vector<8x256xf32>
    %c0_i32_39 = arith.constant 0 : i32
    %101 = arith.addi %0, %c0_i32_39 : i32
    %102 = arith.index_cast %101 : i32 to index
    %103 = memref.load %arg3[%102] : memref<8xi32, #tpu.memory_space<smem>>
    %104 = arith.index_cast %103 : i32 to index
    %c0_40 = arith.constant 0 : index
    %105 = vector.load %arg11[%104, %c0_40] : memref<384x256xf32, #tpu.memory_space<vmem>>, vector<1x256xf32>
    %c1_i32_41 = arith.constant 1 : i32
    %106 = arith.addi %0, %c1_i32_41 : i32
    %107 = arith.index_cast %106 : i32 to index
    %108 = memref.load %arg3[%107] : memref<8xi32, #tpu.memory_space<smem>>
    %109 = arith.index_cast %108 : i32 to index
    %c0_42 = arith.constant 0 : index
    %110 = vector.load %arg11[%109, %c0_42] : memref<384x256xf32, #tpu.memory_space<vmem>>, vector<1x256xf32>
    %c2_i32_43 = arith.constant 2 : i32
    %111 = arith.addi %0, %c2_i32_43 : i32
    %112 = arith.index_cast %111 : i32 to index
    %113 = memref.load %arg3[%112] : memref<8xi32, #tpu.memory_space<smem>>
    %114 = arith.index_cast %113 : i32 to index
    %c0_44 = arith.constant 0 : index
    %115 = vector.load %arg11[%114, %c0_44] : memref<384x256xf32, #tpu.memory_space<vmem>>, vector<1x256xf32>
    %c3_i32_45 = arith.constant 3 : i32
    %116 = arith.addi %0, %c3_i32_45 : i32
    %117 = arith.index_cast %116 : i32 to index
    %118 = memref.load %arg3[%117] : memref<8xi32, #tpu.memory_space<smem>>
    %119 = arith.index_cast %118 : i32 to index
    %c0_46 = arith.constant 0 : index
    %120 = vector.load %arg11[%119, %c0_46] : memref<384x256xf32, #tpu.memory_space<vmem>>, vector<1x256xf32>
    %c4_i32_47 = arith.constant 4 : i32
    %121 = arith.addi %0, %c4_i32_47 : i32
    %122 = arith.index_cast %121 : i32 to index
    %123 = memref.load %arg3[%122] : memref<8xi32, #tpu.memory_space<smem>>
    %124 = arith.index_cast %123 : i32 to index
    %c0_48 = arith.constant 0 : index
    %125 = vector.load %arg11[%124, %c0_48] : memref<384x256xf32, #tpu.memory_space<vmem>>, vector<1x256xf32>
    %c5_i32_49 = arith.constant 5 : i32
    %126 = arith.addi %0, %c5_i32_49 : i32
    %127 = arith.index_cast %126 : i32 to index
    %128 = memref.load %arg3[%127] : memref<8xi32, #tpu.memory_space<smem>>
    %129 = arith.index_cast %128 : i32 to index
    %c0_50 = arith.constant 0 : index
    %130 = vector.load %arg11[%129, %c0_50] : memref<384x256xf32, #tpu.memory_space<vmem>>, vector<1x256xf32>
    %c6_i32_51 = arith.constant 6 : i32
    %131 = arith.addi %0, %c6_i32_51 : i32
    %132 = arith.index_cast %131 : i32 to index
    %133 = memref.load %arg3[%132] : memref<8xi32, #tpu.memory_space<smem>>
    %134 = arith.index_cast %133 : i32 to index
    %c0_52 = arith.constant 0 : index
    %135 = vector.load %arg11[%134, %c0_52] : memref<384x256xf32, #tpu.memory_space<vmem>>, vector<1x256xf32>
    %c7_i32_53 = arith.constant 7 : i32
    %136 = arith.addi %0, %c7_i32_53 : i32
    %137 = arith.index_cast %136 : i32 to index
    %138 = memref.load %arg3[%137] : memref<8xi32, #tpu.memory_space<smem>>
    %139 = arith.index_cast %138 : i32 to index
    %c0_54 = arith.constant 0 : index
    %140 = vector.load %arg11[%139, %c0_54] : memref<384x256xf32, #tpu.memory_space<vmem>>, vector<1x256xf32>
    %141 = tpu.concatenate %105, %110, %115, %120, %125, %130, %135, %140 in 0 : vector<1x256xf32>, vector<1x256xf32>, vector<1x256xf32>, vector<1x256xf32>, vector<1x256xf32>, vector<1x256xf32>, vector<1x256xf32>, vector<1x256xf32> -> vector<8x256xf32>
    %142 = vector.extract_strided_slice %59 {offsets = [0, 0], sizes = [8, 128], strides = [1, 1]} : vector<8x256xf32> to vector<8x128xf32>
    %143 = vector.extract_strided_slice %59 {offsets = [0, 128], sizes = [8, 128], strides = [1, 1]} : vector<8x256xf32> to vector<8x128xf32>
    %144 = vector.extract_strided_slice %100 {offsets = [0, 0], sizes = [8, 128], strides = [1, 1]} : vector<8x256xf32> to vector<8x128xf32>
    %145 = vector.extract_strided_slice %100 {offsets = [0, 128], sizes = [8, 128], strides = [1, 1]} : vector<8x256xf32> to vector<8x128xf32>
    %146 = arith.mulf %142, %144 : vector<8x128xf32>
    %147 = arith.mulf %143, %145 : vector<8x128xf32>
    %148 = arith.mulf %143, %144 : vector<8x128xf32>
    %149 = arith.mulf %142, %145 : vector<8x128xf32>
    %150 = vector.extract_strided_slice %13 {offsets = [0, 0], sizes = [8, 128], strides = [1, 1]} : vector<8x256xf32> to vector<8x128xf32>
    %151 = vector.extract_strided_slice %13 {offsets = [0, 128], sizes = [8, 128], strides = [1, 1]} : vector<8x256xf32> to vector<8x128xf32>
    %152 = arith.subf %146, %147 : vector<8x128xf32>
    %153 = arith.mulf %150, %152 : vector<8x128xf32>
    %154 = arith.subf %149, %148 : vector<8x128xf32>
    %155 = arith.mulf %151, %154 : vector<8x128xf32>
    %156 = arith.addf %153, %155 : vector<8x128xf32>
    %157 = arith.addf %148, %149 : vector<8x128xf32>
    %158 = arith.mulf %150, %157 : vector<8x128xf32>
    %159 = arith.addf %146, %147 : vector<8x128xf32>
    %160 = arith.mulf %151, %159 : vector<8x128xf32>
    %161 = arith.subf %158, %160 : vector<8x128xf32>
    %162 = tpu.concatenate %156, %161 in 1 : vector<8x128xf32>, vector<8x128xf32> -> vector<8x256xf32>
    %163 = arith.truncf %162 : vector<8x256xf32> to vector<8x256xbf16>
    %c0_55 = arith.constant 0 : index
    %c0_56 = arith.constant 0 : index
    %164 = vector.load %arg13[%c0_55, %c0_56] : memref<256x128xbf16, #tpu.memory_space<vmem>>, vector<256x128xbf16>
    %cst_57 = arith.constant dense<0.000000e+00> : vector<8x128xf32>
    %165 = tpu.matmul %163, %164, %cst_57 {dimension_numbers = #tpu.dot_dimension_numbers<[1], [0], [0], [1], [0, 0, 1, 1], [], []>} : vector<8x256xbf16>, vector<256x128xbf16>, vector<8x128xf32> -> vector<8x128xf32>
    %166 = vector.extract_strided_slice %18 {offsets = [0, 0], sizes = [8, 128], strides = [1, 1]} : vector<8x256xf32> to vector<8x128xf32>
    %167 = vector.extract_strided_slice %18 {offsets = [0, 128], sizes = [8, 128], strides = [1, 1]} : vector<8x256xf32> to vector<8x128xf32>
    %168 = vector.extract_strided_slice %141 {offsets = [0, 0], sizes = [8, 128], strides = [1, 1]} : vector<8x256xf32> to vector<8x128xf32>
    %169 = vector.extract_strided_slice %141 {offsets = [0, 128], sizes = [8, 128], strides = [1, 1]} : vector<8x256xf32> to vector<8x128xf32>
    %170 = arith.mulf %166, %168 : vector<8x128xf32>
    %171 = arith.mulf %167, %169 : vector<8x128xf32>
    %172 = arith.subf %170, %171 : vector<8x128xf32>
    %173 = arith.mulf %167, %168 : vector<8x128xf32>
    %174 = arith.mulf %166, %169 : vector<8x128xf32>
    %175 = arith.addf %173, %174 : vector<8x128xf32>
    %176 = arith.mulf %142, %172 : vector<8x128xf32>
    %177 = arith.mulf %143, %175 : vector<8x128xf32>
    %178 = arith.subf %176, %177 : vector<8x128xf32>
    %179 = arith.mulf %143, %172 : vector<8x128xf32>
    %180 = arith.mulf %142, %175 : vector<8x128xf32>
    %181 = arith.addf %179, %180 : vector<8x128xf32>
    %182 = tpu.concatenate %178, %181 in 1 : vector<8x128xf32>, vector<8x128xf32> -> vector<8x256xf32>
    %183 = arith.truncf %182 : vector<8x256xf32> to vector<8x256xbf16>
    %c0_58 = arith.constant 0 : index
    %c0_59 = arith.constant 0 : index
    %184 = vector.load %arg12[%c0_58, %c0_59] : memref<256x256xbf16, #tpu.memory_space<vmem>>, vector<256x256xbf16>
    %cst_60 = arith.constant dense<0.000000e+00> : vector<8x256xf32>
    %185 = tpu.matmul %183, %184, %cst_60 {dimension_numbers = #tpu.dot_dimension_numbers<[1], [0], [0], [1], [0, 0, 1, 1], [], []>} : vector<8x256xbf16>, vector<256x256xbf16>, vector<8x256xf32> -> vector<8x256xf32>
    %c0_61 = arith.constant 0 : index
    %c0_62 = arith.constant 0 : index
    %186 = vector.load %arg14[%c0_61, %c0_62] : memref<8x384xf32, #tpu.memory_space<vmem>>, vector<8x256xf32>
    tpu.vector_store %arg14[%c0_61, %c0_62], %185 {strides = array<i32>} : memref<8x384xf32, #tpu.memory_space<vmem>>, vector<8x256xf32>,
    %c0_63 = arith.constant 0 : index
    %c256 = arith.constant 256 : index
    %187 = vector.load %arg14[%c0_63, %c256] : memref<8x384xf32, #tpu.memory_space<vmem>>, vector<8x128xf32>
    tpu.vector_store %arg14[%c0_63, %c256], %165 {strides = array<i32>} : memref<8x384xf32, #tpu.memory_space<vmem>>, vector<8x128xf32>,
    return
  }
  func.func @transform_0(%arg0: i32, %arg1: memref<8xi32, #tpu.memory_space<smem>>, %arg2: memref<8xi32, #tpu.memory_space<smem>>, %arg3: memref<8xi32, #tpu.memory_space<smem>>) -> (i32, i32) {
    %c0_i32 = arith.constant 0 : i32
    %c0_i32_0 = arith.constant 0 : i32
    return %arg0, %c0_i32 : i32, i32
  }
  func.func @transform_1(%arg0: i32, %arg1: memref<8xi32, #tpu.memory_space<smem>>, %arg2: memref<8xi32, #tpu.memory_space<smem>>, %arg3: memref<8xi32, #tpu.memory_space<smem>>) -> (i32, i32) {
    %c0_i32 = arith.constant 0 : i32
    %c0_i32_0 = arith.constant 0 : i32
    %c0_i32_1 = arith.constant 0 : i32
    return %c0_i32, %c0_i32_0 : i32, i32
  }
  func.func @transform_2(%arg0: i32, %arg1: memref<8xi32, #tpu.memory_space<smem>>, %arg2: memref<8xi32, #tpu.memory_space<smem>>, %arg3: memref<8xi32, #tpu.memory_space<smem>>) -> (i32, i32) {
    %c0_i32 = arith.constant 0 : i32
    %c0_i32_0 = arith.constant 0 : i32
    %c0_i32_1 = arith.constant 0 : i32
    return %c0_i32, %c0_i32_0 : i32, i32
  }
  func.func @transform_3(%arg0: i32, %arg1: memref<8xi32, #tpu.memory_space<smem>>, %arg2: memref<8xi32, #tpu.memory_space<smem>>, %arg3: memref<8xi32, #tpu.memory_space<smem>>) -> (i32, i32) {
    %c0_i32 = arith.constant 0 : i32
    %c0_i32_0 = arith.constant 0 : i32
    %c0_i32_1 = arith.constant 0 : i32
    return %c0_i32, %c0_i32_0 : i32, i32
  }
  func.func @transform_4(%arg0: i32, %arg1: memref<8xi32, #tpu.memory_space<smem>>, %arg2: memref<8xi32, #tpu.memory_space<smem>>, %arg3: memref<8xi32, #tpu.memory_space<smem>>) -> (i32, i32) {
    %c0_i32 = arith.constant 0 : i32
    %c0_i32_0 = arith.constant 0 : i32
    %c0_i32_1 = arith.constant 0 : i32
    return %c0_i32, %c0_i32_0 : i32, i32
  }
  func.func @transform_5(%arg0: i32, %arg1: memref<8xi32, #tpu.memory_space<smem>>, %arg2: memref<8xi32, #tpu.memory_space<smem>>, %arg3: memref<8xi32, #tpu.memory_space<smem>>) -> (i32, i32) {
    %c0_i32 = arith.constant 0 : i32
    %c0_i32_0 = arith.constant 0 : i32
    %c0_i32_1 = arith.constant 0 : i32
    return %c0_i32, %c0_i32_0 : i32, i32
  }
  func.func @transform_6(%arg0: i32, %arg1: memref<8xi32, #tpu.memory_space<smem>>, %arg2: memref<8xi32, #tpu.memory_space<smem>>, %arg3: memref<8xi32, #tpu.memory_space<smem>>) -> (i32, i32) {
    %c0_i32 = arith.constant 0 : i32
    %c0_i32_0 = arith.constant 0 : i32
    %c0_i32_1 = arith.constant 0 : i32
    return %c0_i32, %c0_i32_0 : i32, i32
  }
  func.func @transform_7(%arg0: i32, %arg1: memref<8xi32, #tpu.memory_space<smem>>, %arg2: memref<8xi32, #tpu.memory_space<smem>>, %arg3: memref<8xi32, #tpu.memory_space<smem>>) -> (i32, i32) {
    %c0_i32 = arith.constant 0 : i32
    %c0_i32_0 = arith.constant 0 : i32
    %c0_i32_1 = arith.constant 0 : i32
    return %c0_i32, %c0_i32_0 : i32, i32
  }
  func.func @transform_8(%arg0: i32, %arg1: memref<8xi32, #tpu.memory_space<smem>>, %arg2: memref<8xi32, #tpu.memory_space<smem>>, %arg3: memref<8xi32, #tpu.memory_space<smem>>) -> (i32, i32) {
    %c0_i32 = arith.constant 0 : i32
    %c0_i32_0 = arith.constant 0 : i32
    %c0_i32_1 = arith.constant 0 : i32
    return %c0_i32, %c0_i32_0 : i32, i32
  }
  func.func @transform_9(%arg0: i32, %arg1: memref<8xi32, #tpu.memory_space<smem>>, %arg2: memref<8xi32, #tpu.memory_space<smem>>, %arg3: memref<8xi32, #tpu.memory_space<smem>>) -> (i32, i32) {
    %c0_i32 = arith.constant 0 : i32
    %c0_i32_0 = arith.constant 0 : i32
    %c0_i32_1 = arith.constant 0 : i32
    return %c0_i32, %c0_i32_0 : i32, i32
  }
  func.func @transform_10(%arg0: i32, %arg1: memref<8xi32, #tpu.memory_space<smem>>, %arg2: memref<8xi32, #tpu.memory_space<smem>>, %arg3: memref<8xi32, #tpu.memory_space<smem>>) -> (i32, i32) {
    %c0_i32 = arith.constant 0 : i32
    %c0_i32_0 = arith.constant 0 : i32
    return %arg0, %c0_i32 : i32, i32
  }
}

</mosaic_0001>

<llo_original>
// kernel: qa_baseline_forward.1
$region0: #{qa_baseline_forward.1}
  #allocation0 [shape = 'u32[]', space=smem, size = 0x4, offset = 0x4, fixed_abs, tag = 'smem constant byte address 0x4 - core index']
  #allocation1 [shape = 'u32[144,128]{1,0:T(1,128)}', space=vmem, size = 0x12000, scoped, tag = 'internal scratch']
  #allocation2 [shape = 's32[1]{0}', space=sflag, size = 0x4, scoped, tag = 'scoped memory for qa_baseline_forward.1']
  #allocation3 [shape = 'u8[512]{0}', space=smem, size = 0x200, scoped, tag = 'prefetched SMEM operand 0']
  #allocation4 [shape = 'u8[512]{0}', space=smem, size = 0x200, scoped, tag = 'prefetched SMEM operand 1']
  #allocation5 [shape = 'u8[512]{0}', space=smem, size = 0x200, scoped, tag = 'prefetched SMEM operand 2']
  %s0 = inlined_call_operand.vmem [shape: s32[8], index: 0, kind: input, shape index: {}]
  %s1 = inlined_call_operand.hbm [shape: s32[8], index: 1, kind: input, shape index: {}]
  %s2 = inlined_call_operand.hbm [shape: s32[8], index: 2, kind: input, shape index: {}]
  %s3 = inlined_call_operand.hbm [shape: f32[8,768], index: 3, kind: input, shape index: {}]
  %s4 = inlined_call_operand.hbm [shape: bf16[768,256], index: 4, kind: input, shape index: {}]
  %s5 = inlined_call_operand.vmem [shape: f32[1,256], index: 5, kind: input, shape index: {}]
  %s6 = inlined_call_operand.hbm [shape: bf16[256,256], index: 6, kind: input, shape index: {}]
  %s7 = inlined_call_operand.vmem [shape: f32[1,256], index: 7, kind: input, shape index: {}]
  %s8 = inlined_call_operand.hbm [shape: bf16[256,256], index: 8, kind: input, shape index: {}]
  %s9 = inlined_call_operand.vmem [shape: f32[1,256], index: 9, kind: input, shape index: {}]
  %s10 = inlined_call_operand.hbm [shape: f32[384,256], index: 10, kind: input, shape index: {}]
  %s11 = inlined_call_operand.hbm [shape: bf16[256,256], index: 11, kind: input, shape index: {}]
  %s12 = inlined_call_operand.hbm [shape: bf16[256,128], index: 12, kind: input, shape index: {}]
  %s13 = inlined_call_operand.hbm [shape: f32[8,384], index: 13, kind: output, shape index: {}]
  %s14 = sld [smem:[#allocation0]]
  $region78: #{qa_baseline_forward.1} parent=0
    _
  %s16 = ssub.s32 1, %s14
  %s17 = scalar_select 0, %s16, %s14
  %s18 = sshll.u32 %s0, 4
  %s19 = int_to_ptr.vmem [resolvable:$true] %s18
  %21 = dma.vmem_to_smem %s19, 16, [#allocation3], [#allocation2]
  %23 = dma.hbm_to_smem %s1, 16, [#allocation4], [#allocation2]
  %25 = dma.hbm_to_smem %s2, 16, [#allocation5], [#allocation2]
  %26 = dma.done [#allocation2], 48
  %27 = sfence
  $region1: #{qa_baseline_forward.1} parent=0
    #allocation6 [shape = 'u8[24576]{0}', space=vmem, size = 0x6000, scoped, tag = 'input window, operand 3, single buffered']
    #allocation7 [shape = 's32[1]{0}', space=sflag, size = 0x4, scoped, tag = 'scoped memory for qa_baseline_forward.1']
    #allocation8 [shape = 's32[1]{0}', space=sflag, size = 0x4, scoped, tag = 'scoped memory for qa_baseline_forward.1']
    #allocation9 [shape = 'u8[393216]{0}', space=vmem, size = 0x60000, scoped, tag = 'input window, operand 4, single buffered']
    #allocation10 [shape = 's32[1]{0}', space=sflag, size = 0x4, scoped, tag = 'scoped memory for qa_baseline_forward.1']
    #allocation11 [shape = 'u8[131072]{0}', space=vmem, size = 0x20000, scoped, tag = 'input window, operand 6, single buffered']
    #allocation12 [shape = 'u8[131072]{0}', space=vmem, size = 0x20000, scoped, tag = 'input window, operand 8, single buffered']
    #allocation13 [shape = 's32[1]{0}', space=sflag, size = 0x4, scoped, tag = 'scoped memory for qa_baseline_forward.1']
    #allocation14 [shape = 'u8[393216]{0}', space=vmem, size = 0x60000, scoped, tag = 'input window, operand 10, single buffered']
    #allocation15 [shape = 'u8[131072]{0}', space=vmem, size = 0x20000, scoped, tag = 'input window, operand 11, single buffered']
    #allocation16 [shape = 's32[1]{0}', space=sflag, size = 0x4, scoped, tag = 'scoped memory for qa_baseline_forward.1']
    #allocation17 [shape = 'u8[65536]{0}', space=vmem, size = 0x10000, scoped, tag = 'input window, operand 12, single buffered']
    #allocation18 [shape = 'u8[12288]{0}', space=vmem, size = 0x3000, scoped, tag = 'output window, operand 0, single buffered']
    %28 = vsyncpa [#allocation7], 0
    %29 = vsyncpa [#allocation10], 0
    %30 = vsyncpa [#allocation13], 0
    %31 = vsyncpa [#allocation16], 0
    %32 = vsyncpa [#allocation8], 0
    // Predicated region
    $region2: #{qa_baseline_forward.1} parent=1 // pred_check
      _
    $region3: #{qa_baseline_forward.1} parent=1 // pred_check_branch
      %34 = sbr.rel (0) target = $region5
    $region4: #{qa_baseline_forward.1} parent=1 // pred_region
      %s36 = ssub.s32 768, 768
      %37 = vsyncadd [#allocation7], %s36
      %s39 = sshll.u32 [#allocation6], 4
      %s40 = int_to_ptr.vmem [resolvable:$true] %s39
      %42 = dma.hbm_to_vmem [thread:$0]  %s3, 768, %s40, [#allocation7]
    $region5: #{qa_baseline_forward.1} parent=1 // pred_fallthru
      _
    // Predicated region
    $region6: #{qa_baseline_forward.1} parent=1 // pred_check
      _
    $region7: #{qa_baseline_forward.1} parent=1 // pred_check_branch
      %44 = sbr.rel (0) target = $region9
    $region8: #{qa_baseline_forward.1} parent=1 // pred_region
      %s46 = ssub.s32 12288, 12288
      %47 = vsyncadd [#allocation10], %s46
      %s48 = sshll.u32 [#allocation9], 4
      %s49 = int_to_ptr.vmem [resolvable:$true] %s48
      %54 = dma.hbm_to_vmem [thread:$0]  %s4, 12288, %s49, [#allocation10], 128, 128, 8
    $region9: #{qa_baseline_forward.1} parent=1 // pred_fallthru
      _
    // Predicated region
    $region10: #{qa_baseline_forward.1} parent=1 // pred_check
      _
    $region11: #{qa_baseline_forward.1} parent=1 // pred_check_branch
      %56 = sbr.rel (0) target = $region13
    $region12: #{qa_baseline_forward.1} parent=1 // pred_region
      _
    $region13: #{qa_baseline_forward.1} parent=1 // pred_fallthru
      _
    // Predicated region
    $region14: #{qa_baseline_forward.1} parent=1 // pred_check
      _
    $region15: #{qa_baseline_forward.1} parent=1 // pred_check_branch
      %58 = sbr.rel (0) target = $region17
    $region16: #{qa_baseline_forward.1} parent=1 // pred_region
      %s60 = ssub.s32 4096, 4096
      %61 = vsyncadd [#allocation10], %s60
      %s62 = sshll.u32 [#allocation11], 4
      %s63 = int_to_ptr.vmem [resolvable:$true] %s62
      %68 = dma.hbm_to_vmem [thread:$0]  %s6, 4096, %s63, [#allocation10], 128, 128, 8
    $region17: #{qa_baseline_forward.1} parent=1 // pred_fallthru
      _
    // Predicated region
    $region18: #{qa_baseline_forward.1} parent=1 // pred_check
      _
    $region19: #{qa_baseline_forward.1} parent=1 // pred_check_branch
      %70 = sbr.rel (0) target = $region21
    $region20: #{qa_baseline_forward.1} parent=1 // pred_region
      _
    $region21: #{qa_baseline_forward.1} parent=1 // pred_fallthru
      _
    // Predicated region
    $region22: #{qa_baseline_forward.1} parent=1 // pred_check
      _
    $region23: #{qa_baseline_forward.1} parent=1 // pred_check_branch
      %72 = sbr.rel (0) target = $region25
    $region24: #{qa_baseline_forward.1} parent=1 // pred_region
      %s74 = ssub.s32 4096, 4096
      %75 = vsyncadd [#allocation13], %s74
      %s76 = sshll.u32 [#allocation12], 4
      %s77 = int_to_ptr.vmem [resolvable:$true] %s76
      %82 = dma.hbm_to_vmem [thread:$0]  %s8, 4096, %s77, [#allocation13], 128, 128, 8
    $region25: #{qa_baseline_forward.1} parent=1 // pred_fallthru
      _
    // Predicated region
    $region26: #{qa_baseline_forward.1} parent=1 // pred_check
      _
    $region27: #{qa_baseline_forward.1} parent=1 // pred_check_branch
      %84 = sbr.rel (0) target = $region29
    $region28: #{qa_baseline_forward.1} parent=1 // pred_region
      _
    $region29: #{qa_baseline_forward.1} parent=1 // pred_fallthru
      _
    // Predicated region
    $region30: #{qa_baseline_forward.1} parent=1 // pred_check
      _
    $region31: #{qa_baseline_forward.1} parent=1 // pred_check_branch
      %86 = sbr.rel (0) target = $region33
    $region32: #{qa_baseline_forward.1} parent=1 // pred_region
      %s88 = ssub.s32 12288, 12288
      %89 = vsyncadd [#allocation13], %s88
      %s90 = sshll.u32 [#allocation14], 4
      %s91 = int_to_ptr.vmem [resolvable:$true] %s90
      %96 = dma.hbm_to_vmem [thread:$0]  %s10, 12288, %s91, [#allocation13], 256, 256, 16
    $region33: #{qa_baseline_forward.1} parent=1 // pred_fallthru
      _
    // Predicated region
    $region34: #{qa_baseline_forward.1} parent=1 // pred_check
      _
    $region35: #{qa_baseline_forward.1} parent=1 // pred_check_branch
      %98 = sbr.rel (0) target = $region37
    $region36: #{qa_baseline_forward.1} parent=1 // pred_region
      %s100 = ssub.s32 4096, 4096
      %101 = vsyncadd [#allocation16], %s100
      %s102 = sshll.u32 [#allocation15], 4
      %s103 = int_to_ptr.vmem [resolvable:$true] %s102
      %108 = dma.hbm_to_vmem [thread:$0]  %s11, 4096, %s103, [#allocation16], 128, 128, 8
    $region37: #{qa_baseline_forward.1} parent=1 // pred_fallthru
      _
    // Predicated region
    $region38: #{qa_baseline_forward.1} parent=1 // pred_check
      _
    $region39: #{qa_baseline_forward.1} parent=1 // pred_check_branch
      %110 = sbr.rel (0) target = $region41
    $region40: #{qa_baseline_forward.1} parent=1 // pred_region
      %s112 = ssub.s32 2048, 2048
      %113 = vsyncadd [#allocation16], %s112
      %s114 = sshll.u32 [#allocation17], 4
      %s115 = int_to_ptr.vmem [resolvable:$true] %s114
      %120 = dma.hbm_to_vmem [thread:$0]  %s12, 2048, %s115, [#allocation16], 64, 64, 4
    $region41: #{qa_baseline_forward.1} parent=1 // pred_fallthru
      _
    // Predicated region
    $region42: #{qa_baseline_forward.1} parent=1 // pred_check
      _
    $region43: #{qa_baseline_forward.1} parent=1 // pred_check_branch
      %122 = sbr.rel (0) target = $region45
    $region44: #{qa_baseline_forward.1} parent=1 // pred_region
      %123 = dma.done [#allocation7], 768
    $region45: #{qa_baseline_forward.1} parent=1 // pred_fallthru
      _
    // Predicated region
    $region46: #{qa_baseline_forward.1} parent=1 // pred_check
      _
    $region47: #{qa_baseline_forward.1} parent=1 // pred_check_branch
      %125 = sbr.rel (0) target = $region49
    $region48: #{qa_baseline_forward.1} parent=1 // pred_region
      %126 = dma.done [#allocation10], 12288
    $region49: #{qa_baseline_forward.1} parent=1 // pred_fallthru
      _
    // Predicated region
    $region50: #{qa_baseline_forward.1} parent=1 // pred_check
      _
    $region51: #{qa_baseline_forward.1} parent=1 // pred_check_branch
      %128 = sbr.rel (0) target = $region53
    $region52: #{qa_baseline_forward.1} parent=1 // pred_region
      %129 = dma.done [#allocation10], 4096
    $region53: #{qa_baseline_forward.1} parent=1 // pred_fallthru
      _
    // Predicated region
    $region54: #{qa_baseline_forward.1} parent=1 // pred_check
      _
    $region55: #{qa_baseline_forward.1} parent=1 // pred_check_branch
      %131 = sbr.rel (0) target = $region57
    $region56: #{qa_baseline_forward.1} parent=1 // pred_region
      %132 = dma.done [#allocation13], 4096
    $region57: #{qa_baseline_forward.1} parent=1 // pred_fallthru
      _
    // Predicated region
    $region58: #{qa_baseline_forward.1} parent=1 // pred_check
      _
    $region59: #{qa_baseline_forward.1} parent=1 // pred_check_branch
      %134 = sbr.rel (0) target = $region61
    $region60: #{qa_baseline_forward.1} parent=1 // pred_region
      %135 = dma.done [#allocation13], 12288
    $region61: #{qa_baseline_forward.1} parent=1 // pred_fallthru
      _
    // Predicated region
    $region62: #{qa_baseline_forward.1} parent=1 // pred_check
      _
    $region63: #{qa_baseline_forward.1} parent=1 // pred_check_branch
      %137 = sbr.rel (0) target = $region65
    $region64: #{qa_baseline_forward.1} parent=1 // pred_region
      %138 = dma.done [#allocation16], 4096
    $region65: #{qa_baseline_forward.1} parent=1 // pred_fallthru
      _
    // Predicated region
    $region66: #{qa_baseline_forward.1} parent=1 // pred_check
      _
    $region67: #{qa_baseline_forward.1} parent=1 // pred_check_branch
      %140 = sbr.rel (0) target = $region69
    $region68: #{qa_baseline_forward.1} parent=1 // pred_region
      %141 = dma.done [#allocation16], 2048
    $region69: #{qa_baseline_forward.1} parent=1 // pred_fallthru
      _
    %s143 = smul.u32 0, 8
    %v144 = vld [vmem:[#allocation6] sm:$0xff]
    %v145 = vld [vmem:[#allocation6 + $0x8] sm:$0xff]
    %v146 = vld [vmem:[#allocation6 + $0x10] sm:$0xff]
    %v147 = vld [vmem:[#allocation6 + $0x18] sm:$0xff]
    %v148 = vld [vmem:[#allocation6 + $0x20] sm:$0xff]
    %v149 = vld [vmem:[#allocation6 + $0x28] sm:$0xff]
    %v150 = vpack.c.bf16 %v144, %v144
    %v151 = vpack.c.bf16 %v145, %v145
    %v152 = vpack.c.bf16 %v146, %v146
    %v153 = vpack.c.bf16 %v147, %v147
    %v154 = vpack.c.bf16 %v148, %v148
    %v155 = vpack.c.bf16 %v149, %v149
    %v156 = vld [vmem:[#allocation9] sm:$0xff]
    %v157 = vld [vmem:[#allocation9 + $0x8] sm:$0xff]
    %v158 = vld [vmem:[#allocation9 + $0x10] sm:$0xff]
    %v159 = vld [vmem:[#allocation9 + $0x18] sm:$0xff]
    %v160 = vld [vmem:[#allocation9 + $0x20] sm:$0xff]
    %v161 = vld [vmem:[#allocation9 + $0x28] sm:$0xff]
    %v162 = vld [vmem:[#allocation9 + $0x30] sm:$0xff]
    %v163 = vld [vmem:[#allocation9 + $0x38] sm:$0xff]
    %v164 = vld [vmem:[#allocation9 + $0x40] sm:$0xff]
    %v165 = vld [vmem:[#allocation9 + $0x48] sm:$0xff]
    %v166 = vld [vmem:[#allocation9 + $0x50] sm:$0xff]
    %v167 = vld [vmem:[#allocation9 + $0x58] sm:$0xff]
    %v168 = vld [vmem:[#allocation9 + $0x60] sm:$0xff]
    %v169 = vld [vmem:[#allocation9 + $0x68] sm:$0xff]
    %v170 = vld [vmem:[#allocation9 + $0x70] sm:$0xff]
    %v171 = vld [vmem:[#allocation9 + $0x78] sm:$0xff]
    %v172 = vld [vmem:[#allocation9 + $0x80] sm:$0xff]
    %v173 = vld [vmem:[#allocation9 + $0x88] sm:$0xff]
    %v174 = vld [vmem:[#allocation9 + $0x90] sm:$0xff]
    %v175 = vld [vmem:[#allocation9 + $0x98] sm:$0xff]
    %v176 = vld [vmem:[#allocation9 + $0xa0] sm:$0xff]
    %v177 = vld [vmem:[#allocation9 + $0xa8] sm:$0xff]
    %v178 = vld [vmem:[#allocation9 + $0xb0] sm:$0xff]
    %v179 = vld [vmem:[#allocation9 + $0xb8] sm:$0xff]
    %v180 = vld [vmem:[#allocation9 + $0xc0] sm:$0xff]
    %v181 = vld [vmem:[#allocation9 + $0xc8] sm:$0xff]
    %v182 = vld [vmem:[#allocation9 + $0xd0] sm:$0xff]
    %v183 = vld [vmem:[#allocation9 + $0xd8] sm:$0xff]
    %v184 = vld [vmem:[#allocation9 + $0xe0] sm:$0xff]
    %v185 = vld [vmem:[#allocation9 + $0xe8] sm:$0xff]
    %v186 = vld [vmem:[#allocation9 + $0xf0] sm:$0xff]
    %v187 = vld [vmem:[#allocation9 + $0xf8] sm:$0xff]
    %v188 = vld [vmem:[#allocation9 + $0x100] sm:$0xff]
    %v189 = vld [vmem:[#allocation9 + $0x108] sm:$0xff]
    %v190 = vld [vmem:[#allocation9 + $0x110] sm:$0xff]
    %v191 = vld [vmem:[#allocation9 + $0x118] sm:$0xff]
    %v192 = vld [vmem:[#allocation9 + $0x120] sm:$0xff]
    %v193 = vld [vmem:[#allocation9 + $0x128] sm:$0xff]
    %v194 = vld [vmem:[#allocation9 + $0x130] sm:$0xff]
    %v195 = vld [vmem:[#allocation9 + $0x138] sm:$0xff]
    %v196 = vld [vmem:[#allocation9 + $0x140] sm:$0xff]
    %v197 = vld [vmem:[#allocation9 + $0x148] sm:$0xff]
    %v198 = vld [vmem:[#allocation9 + $0x150] sm:$0xff]
    %v199 = vld [vmem:[#allocation9 + $0x158] sm:$0xff]
    %v200 = vld [vmem:[#allocation9 + $0x160] sm:$0xff]
    %v201 = vld [vmem:[#allocation9 + $0x168] sm:$0xff]
    %v202 = vld [vmem:[#allocation9 + $0x170] sm:$0xff]
    %v203 = vld [vmem:[#allocation9 + $0x178] sm:$0xff]
    %v204 = vld [vmem:[#allocation9 + $0x180] sm:$0xff]
    %v205 = vld [vmem:[#allocation9 + $0x188] sm:$0xff]
    %v206 = vld [vmem:[#allocation9 + $0x190] sm:$0xff]
    %v207 = vld [vmem:[#allocation9 + $0x198] sm:$0xff]
    %v208 = vld [vmem:[#allocation9 + $0x1a0] sm:$0xff]
    %v209 = vld [vmem:[#allocation9 + $0x1a8] sm:$0xff]
    %v210 = vld [vmem:[#allocation9 + $0x1b0] sm:$0xff]
    %v211 = vld [vmem:[#allocation9 + $0x1b8] sm:$0xff]
    %v212 = vld [vmem:[#allocation9 + $0x1c0] sm:$0xff]
    %v213 = vld [vmem:[#allocation9 + $0x1c8] sm:$0xff]
    %v214 = vld [vmem:[#allocation9 + $0x1d0] sm:$0xff]
    %v215 = vld [vmem:[#allocation9 + $0x1d8] sm:$0xff]
    %v216 = vld [vmem:[#allocation9 + $0x1e0] sm:$0xff]
    %v217 = vld [vmem:[#allocation9 + $0x1e8] sm:$0xff]
    %v218 = vld [vmem:[#allocation9 + $0x1f0] sm:$0xff]
    %v219 = vld [vmem:[#allocation9 + $0x1f8] sm:$0xff]
    %v220 = vld [vmem:[#allocation9 + $0x200] sm:$0xff]
    %v221 = vld [vmem:[#allocation9 + $0x208] sm:$0xff]
    %v222 = vld [vmem:[#allocation9 + $0x210] sm:$0xff]
    %v223 = vld [vmem:[#allocation9 + $0x218] sm:$0xff]
    %v224 = vld [vmem:[#allocation9 + $0x220] sm:$0xff]
    %v225 = vld [vmem:[#allocation9 + $0x228] sm:$0xff]
    %v226 = vld [vmem:[#allocation9 + $0x230] sm:$0xff]
    %v227 = vld [vmem:[#allocation9 + $0x238] sm:$0xff]
    %v228 = vld [vmem:[#allocation9 + $0x240] sm:$0xff]
    %v229 = vld [vmem:[#allocation9 + $0x248] sm:$0xff]
    %v230 = vld [vmem:[#allocation9 + $0x250] sm:$0xff]
    %v231 = vld [vmem:[#allocation9 + $0x258] sm:$0xff]
    %v232 = vld [vmem:[#allocation9 + $0x260] sm:$0xff]
    %v233 = vld [vmem:[#allocation9 + $0x268] sm:$0xff]
    %v234 = vld [vmem:[#allocation9 + $0x270] sm:$0xff]
    %v235 = vld [vmem:[#allocation9 + $0x278] sm:$0xff]
    %v236 = vld [vmem:[#allocation9 + $0x280] sm:$0xff]
    %v237 = vld [vmem:[#allocation9 + $0x288] sm:$0xff]
    %v238 = vld [vmem:[#allocation9 + $0x290] sm:$0xff]
    %v239 = vld [vmem:[#allocation9 + $0x298] sm:$0xff]
    %v240 = vld [vmem:[#allocation9 + $0x2a0] sm:$0xff]
    %v241 = vld [vmem:[#allocation9 + $0x2a8] sm:$0xff]
    %v242 = vld [vmem:[#allocation9 + $0x2b0] sm:$0xff]
    %v243 = vld [vmem:[#allocation9 + $0x2b8] sm:$0xff]
    %v244 = vld [vmem:[#allocation9 + $0x2c0] sm:$0xff]
    %v245 = vld [vmem:[#allocation9 + $0x2c8] sm:$0xff]
    %v246 = vld [vmem:[#allocation9 + $0x2d0] sm:$0xff]
    %v247 = vld [vmem:[#allocation9 + $0x2d8] sm:$0xff]
    %v248 = vld [vmem:[#allocation9 + $0x2e0] sm:$0xff]
    %v249 = vld [vmem:[#allocation9 + $0x2e8] sm:$0xff]
    %v250 = vld [vmem:[#allocation9 + $0x2f0] sm:$0xff]
    %v251 = vld [vmem:[#allocation9 + $0x2f8] sm:$0xff]
    %v252 = vld [vmem:[%s5] sm:$0x3]
    %v254 = vlaneseq
    %v255 = vshrl.u32 %v254, 7
    %v256 = vsub.s32 0, %v255
    %v257 = vrot.slane %v252, %v256
    %v258 = vlaneseq
    %v259 = vshrl.u32 %v258, 7
    %v260 = vsub.s32 1, %v259
    %v261 = vrot.slane %v252, %v260
    %v360 = vunpack.c.l.b16 %v156
    %v361 = vunpack.c.h.b16 %v156
    %v362 = vunpack.c.l.b16 %v157
    %v363 = vunpack.c.h.b16 %v157
    %v364 = vunpack.c.l.b16 %v158
    %v365 = vunpack.c.h.b16 %v158
    %v366 = vunpack.c.l.b16 %v159
    %v367 = vunpack.c.h.b16 %v159
    %v368 = vunpack.c.l.b16 %v160
    %v369 = vunpack.c.h.b16 %v160
    %v370 = vunpack.c.l.b16 %v161
    %v371 = vunpack.c.h.b16 %v161
    %v372 = vunpack.c.l.b16 %v162
    %v373 = vunpack.c.h.b16 %v162
    %v374 = vunpack.c.l.b16 %v163
    %v375 = vunpack.c.h.b16 %v163
    %v376 = vunpack.c.l.b16 %v164
    %v377 = vunpack.c.h.b16 %v164
    %v378 = vunpack.c.l.b16 %v165
    %v379 = vunpack.c.h.b16 %v165
    %v380 = vunpack.c.l.b16 %v166
    %v381 = vunpack.c.h.b16 %v166
    %v382 = vunpack.c.l.b16 %v167
    %v383 = vunpack.c.h.b16 %v167
    %v384 = vunpack.c.l.b16 %v168
    %v385 = vunpack.c.h.b16 %v168
    %v386 = vunpack.c.l.b16 %v169
    %v387 = vunpack.c.h.b16 %v169
    %v388 = vunpack.c.l.b16 %v170
    %v389 = vunpack.c.h.b16 %v170
    %v390 = vunpack.c.l.b16 %v171
    %v391 = vunpack.c.h.b16 %v171
    %v392 = vunpack.c.l.b16 %v172
    %v393 = vunpack.c.h.b16 %v172
    %v394 = vunpack.c.l.b16 %v173
    %v395 = vunpack.c.h.b16 %v173
    %v396 = vunpack.c.l.b16 %v174
    %v397 = vunpack.c.h.b16 %v174
    %v398 = vunpack.c.l.b16 %v175
    %v399 = vunpack.c.h.b16 %v175
    %v400 = vunpack.c.l.b16 %v176
    %v401 = vunpack.c.h.b16 %v176
    %v402 = vunpack.c.l.b16 %v177
    %v403 = vunpack.c.h.b16 %v177
    %v404 = vunpack.c.l.b16 %v178
    %v405 = vunpack.c.h.b16 %v178
    %v406 = vunpack.c.l.b16 %v179
    %v407 = vunpack.c.h.b16 %v179
    %v408 = vunpack.c.l.b16 %v180
    %v409 = vunpack.c.h.b16 %v180
    %v410 = vunpack.c.l.b16 %v181
    %v411 = vunpack.c.h.b16 %v181
    %v412 = vunpack.c.l.b16 %v182
    %v413 = vunpack.c.h.b16 %v182
    %v414 = vunpack.c.l.b16 %v183
    %v415 = vunpack.c.h.b16 %v183
    %v416 = vunpack.c.l.b16 %v184
    %v417 = vunpack.c.h.b16 %v184
    %v418 = vunpack.c.l.b16 %v185
    %v419 = vunpack.c.h.b16 %v185
    %v420 = vunpack.c.l.b16 %v186
    %v421 = vunpack.c.h.b16 %v186
    %v422 = vunpack.c.l.b16 %v187
    %v423 = vunpack.c.h.b16 %v187
    %v424 = vunpack.c.l.b16 %v188
    %v425 = vunpack.c.h.b16 %v188
    %v426 = vunpack.c.l.b16 %v189
    %v427 = vunpack.c.h.b16 %v189
    %v428 = vunpack.c.l.b16 %v190
    %v429 = vunpack.c.h.b16 %v190
    %v430 = vunpack.c.l.b16 %v191
    %v431 = vunpack.c.h.b16 %v191
    %v432 = vunpack.c.l.b16 %v192
    %v433 = vunpack.c.h.b16 %v192
    %v434 = vunpack.c.l.b16 %v193
    %v435 = vunpack.c.h.b16 %v193
    %v436 = vunpack.c.l.b16 %v194
    %v437 = vunpack.c.h.b16 %v194
    %v438 = vunpack.c.l.b16 %v195
    %v439 = vunpack.c.h.b16 %v195
    %v440 = vunpack.c.l.b16 %v196
    %v441 = vunpack.c.h.b16 %v196
    %v442 = vunpack.c.l.b16 %v197
    %v443 = vunpack.c.h.b16 %v197
    %v444 = vunpack.c.l.b16 %v198
    %v445 = vunpack.c.h.b16 %v198
    %v446 = vunpack.c.l.b16 %v199
    %v447 = vunpack.c.h.b16 %v199
    %v448 = vunpack.c.l.b16 %v200
    %v449 = vunpack.c.h.b16 %v200
    %v450 = vunpack.c.l.b16 %v201
    %v451 = vunpack.c.h.b16 %v201
    %v452 = vunpack.c.l.b16 %v202
    %v453 = vunpack.c.h.b16 %v202
    %v454 = vunpack.c.l.b16 %v203
    %v455 = vunpack.c.h.b16 %v203
    %v456 = vunpack.c.l.b16 %v204
    %v457 = vunpack.c.h.b16 %v204
    %v458 = vunpack.c.l.b16 %v205
    %v459 = vunpack.c.h.b16 %v205
    %v460 = vunpack.c.l.b16 %v206
    %v461 = vunpack.c.h.b16 %v206
    %v462 = vunpack.c.l.b16 %v207
    %v463 = vunpack.c.h.b16 %v207
    %v464 = vunpack.c.l.b16 %v208
    %v465 = vunpack.c.h.b16 %v208
    %v466 = vunpack.c.l.b16 %v209
    %v467 = vunpack.c.h.b16 %v209
    %v468 = vunpack.c.l.b16 %v210
    %v469 = vunpack.c.h.b16 %v210
    %v470 = vunpack.c.l.b16 %v211
    %v471 = vunpack.c.h.b16 %v211
    %v472 = vunpack.c.l.b16 %v212
    %v473 = vunpack.c.h.b16 %v212
    %v474 = vunpack.c.l.b16 %v213
    %v475 = vunpack.c.h.b16 %v213
    %v476 = vunpack.c.l.b16 %v214
    %v477 = vunpack.c.h.b16 %v214
    %v478 = vunpack.c.l.b16 %v215
    %v479 = vunpack.c.h.b16 %v215
    %v480 = vunpack.c.l.b16 %v216
    %v481 = vunpack.c.h.b16 %v216
    %v482 = vunpack.c.l.b16 %v217
    %v483 = vunpack.c.h.b16 %v217
    %v484 = vunpack.c.l.b16 %v218
    %v485 = vunpack.c.h.b16 %v218
    %v486 = vunpack.c.l.b16 %v219
    %v487 = vunpack.c.h.b16 %v219
    %v488 = vunpack.c.l.b16 %v220
    %v489 = vunpack.c.h.b16 %v220
    %v490 = vunpack.c.l.b16 %v221
    %v491 = vunpack.c.h.b16 %v221
    %v492 = vunpack.c.l.b16 %v222
    %v493 = vunpack.c.h.b16 %v222
    %v494 = vunpack.c.l.b16 %v223
    %v495 = vunpack.c.h.b16 %v223
    %v496 = vunpack.c.l.b16 %v224
    %v497 = vunpack.c.h.b16 %v224
    %v498 = vunpack.c.l.b16 %v225
    %v499 = vunpack.c.h.b16 %v225
    %v500 = vunpack.c.l.b16 %v226
    %v501 = vunpack.c.h.b16 %v226
    %v502 = vunpack.c.l.b16 %v227
    %v503 = vunpack.c.h.b16 %v227
    %v504 = vunpack.c.l.b16 %v228
    %v505 = vunpack.c.h.b16 %v228
    %v506 = vunpack.c.l.b16 %v229
    %v507 = vunpack.c.h.b16 %v229
    %v508 = vunpack.c.l.b16 %v230
    %v509 = vunpack.c.h.b16 %v230
    %v510 = vunpack.c.l.b16 %v231
    %v511 = vunpack.c.h.b16 %v231
    %v512 = vunpack.c.l.b16 %v232
    %v513 = vunpack.c.h.b16 %v232
    %v514 = vunpack.c.l.b16 %v233
    %v515 = vunpack.c.h.b16 %v233
    %v516 = vunpack.c.l.b16 %v234
    %v517 = vunpack.c.h.b16 %v234
    %v518 = vunpack.c.l.b16 %v235
    %v519 = vunpack.c.h.b16 %v235
    %v520 = vunpack.c.l.b16 %v236
    %v521 = vunpack.c.h.b16 %v236
    %v522 = vunpack.c.l.b16 %v237
    %v523 = vunpack.c.h.b16 %v237
    %v524 = vunpack.c.l.b16 %v238
    %v525 = vunpack.c.h.b16 %v238
    %v526 = vunpack.c.l.b16 %v239
    %v527 = vunpack.c.h.b16 %v239
    %v528 = vunpack.c.l.b16 %v240
    %v529 = vunpack.c.h.b16 %v240
    %v530 = vunpack.c.l.b16 %v241
    %v531 = vunpack.c.h.b16 %v241
    %v532 = vunpack.c.l.b16 %v242
    %v533 = vunpack.c.h.b16 %v242
    %v534 = vunpack.c.l.b16 %v243
    %v535 = vunpack.c.h.b16 %v243
    %v536 = vunpack.c.l.b16 %v244
    %v537 = vunpack.c.h.b16 %v244
    %v538 = vunpack.c.l.b16 %v245
    %v539 = vunpack.c.h.b16 %v245
    %v540 = vunpack.c.l.b16 %v246
    %v541 = vunpack.c.h.b16 %v246
    %v542 = vunpack.c.l.b16 %v247
    %v543 = vunpack.c.h.b16 %v247
    %v544 = vunpack.c.l.b16 %v248
    %v545 = vunpack.c.h.b16 %v248
    %v546 = vunpack.c.l.b16 %v249
    %v547 = vunpack.c.h.b16 %v249
    %v548 = vunpack.c.l.b16 %v250
    %v549 = vunpack.c.h.b16 %v250
    %v550 = vunpack.c.l.b16 %v251
    %v551 = vunpack.c.h.b16 %v251
    %v552 = vpack.c.b16 %v362, %v360
    %v553 = vpack.c.b16 %v363, %v361
    %v554 = vpack.c.b16 %v366, %v364
    %v555 = vpack.c.b16 %v367, %v365
    %v556 = vpack.c.b16 %v370, %v368
    %v557 = vpack.c.b16 %v371, %v369
    %v558 = vpack.c.b16 %v374, %v372
    %v559 = vpack.c.b16 %v375, %v373
    %v560 = vpack.c.b16 %v378, %v376
    %v561 = vpack.c.b16 %v379, %v377
    %v562 = vpack.c.b16 %v382, %v380
    %v563 = vpack.c.b16 %v383, %v381
    %v564 = vpack.c.b16 %v386, %v384
    %v565 = vpack.c.b16 %v387, %v385
    %v566 = vpack.c.b16 %v390, %v388
    %v567 = vpack.c.b16 %v391, %v389
    %v568 = vpack.c.b16 %v394, %v392
    %v569 = vpack.c.b16 %v395, %v393
    %v570 = vpack.c.b16 %v398, %v396
    %v571 = vpack.c.b16 %v399, %v397
    %v572 = vpack.c.b16 %v402, %v400
    %v573 = vpack.c.b16 %v403, %v401
    %v574 = vpack.c.b16 %v406, %v404
    %v575 = vpack.c.b16 %v407, %v405
    %v576 = vpack.c.b16 %v410, %v408
    %v577 = vpack.c.b16 %v411, %v409
    %v578 = vpack.c.b16 %v414, %v412
    %v579 = vpack.c.b16 %v415, %v413
    %v580 = vpack.c.b16 %v418, %v416
    %v581 = vpack.c.b16 %v419, %v417
    %v582 = vpack.c.b16 %v422, %v420
    %v583 = vpack.c.b16 %v423, %v421
    %v584 = vpack.c.b16 %v426, %v424
    %v585 = vpack.c.b16 %v427, %v425
    %v586 = vpack.c.b16 %v430, %v428
    %v587 = vpack.c.b16 %v431, %v429
    %v588 = vpack.c.b16 %v434, %v432
    %v589 = vpack.c.b16 %v435, %v433
    %v590 = vpack.c.b16 %v438, %v436
    %v591 = vpack.c.b16 %v439, %v437
    %v592 = vpack.c.b16 %v442, %v440
    %v593 = vpack.c.b16 %v443, %v441
    %v594 = vpack.c.b16 %v446, %v444
    %v595 = vpack.c.b16 %v447, %v445
    %v596 = vpack.c.b16 %v450, %v448
    %v597 = vpack.c.b16 %v451, %v449
    %v598 = vpack.c.b16 %v454, %v452
    %v599 = vpack.c.b16 %v455, %v453
    %v600 = vpack.c.b16 %v458, %v456
    %v601 = vpack.c.b16 %v459, %v457
    %v602 = vpack.c.b16 %v462, %v460
    %v603 = vpack.c.b16 %v463, %v461
    %v604 = vpack.c.b16 %v466, %v464
    %v605 = vpack.c.b16 %v467, %v465
    %v606 = vpack.c.b16 %v470, %v468
    %v607 = vpack.c.b16 %v471, %v469
    %v608 = vpack.c.b16 %v474, %v472
    %v609 = vpack.c.b16 %v475, %v473
    %v610 = vpack.c.b16 %v478, %v476
    %v611 = vpack.c.b16 %v479, %v477
    %v612 = vpack.c.b16 %v482, %v480
    %v613 = vpack.c.b16 %v483, %v481
    %v614 = vpack.c.b16 %v486, %v484
    %v615 = vpack.c.b16 %v487, %v485
    %v616 = vpack.c.b16 %v490, %v488
    %v617 = vpack.c.b16 %v491, %v489
    %v618 = vpack.c.b16 %v494, %v492
    %v619 = vpack.c.b16 %v495, %v493
    %v620 = vpack.c.b16 %v498, %v496
    %v621 = vpack.c.b16 %v499, %v497
    %v622 = vpack.c.b16 %v502, %v500
    %v623 = vpack.c.b16 %v503, %v501
    %v624 = vpack.c.b16 %v506, %v504
    %v625 = vpack.c.b16 %v507, %v505
    %v626 = vpack.c.b16 %v510, %v508
    %v627 = vpack.c.b16 %v511, %v509
    %v628 = vpack.c.b16 %v514, %v512
    %v629 = vpack.c.b16 %v515, %v513
    %v630 = vpack.c.b16 %v518, %v516
    %v631 = vpack.c.b16 %v519, %v517
    %v632 = vpack.c.b16 %v522, %v520
    %v633 = vpack.c.b16 %v523, %v521
    %v634 = vpack.c.b16 %v526, %v524
    %v635 = vpack.c.b16 %v527, %v525
    %v636 = vpack.c.b16 %v530, %v528
    %v637 = vpack.c.b16 %v531, %v529
    %v638 = vpack.c.b16 %v534, %v532
    %v639 = vpack.c.b16 %v535, %v533
    %v640 = vpack.c.b16 %v538, %v536
    %v641 = vpack.c.b16 %v539, %v537
    %v642 = vpack.c.b16 %v542, %v540
    %v643 = vpack.c.b16 %v543, %v541
    %v644 = vpack.c.b16 %v546, %v544
    %v645 = vpack.c.b16 %v547, %v545
    %v646 = vpack.c.b16 %v550, %v548
    %v647 = vpack.c.b16 %v551, %v549
    %744 = vmatprep.subr.bf16.mxu0 %v567
    %745 = vmatpush1.bf16.msra.mxu0 %v566
    %746 = vmatprep.subr.bf16.mxu0 %v565
    %747 = vmatpush1.bf16.msra.mxu0 %v564
    %748 = vmatprep.subr.bf16.mxu0 %v563
    %749 = vmatpush1.bf16.msra.mxu0 %v562
    %750 = vmatprep.subr.bf16.mxu0 %v561
    %751 = vmatpush1.bf16.msra.mxu0 %v560
    %752 = vmatprep.subr.bf16.mxu0 %v559
    %753 = vmatpush1.bf16.msra.mxu0 %v558
    %754 = vmatprep.subr.bf16.mxu0 %v557
    %755 = vmatpush1.bf16.msra.mxu0 %v556
    %756 = vmatprep.subr.bf16.mxu0 %v555
    %757 = vmatpush1.bf16.msra.mxu0 %v554
    %758 = vmatprep.subr.bf16.mxu0 %v553
    %759 = vmatpush1.bf16.msra.mxu0 %v552
    %760 = vmatprep.subr.bf16.mxu0 %v583
    %761 = vmatpush2.bf16.msra.mxu0 %v582
    %762 = vmatprep.subr.bf16.mxu0 %v581
    %763 = vmatpush2.bf16.msra.mxu0 %v580
    %764 = vmatprep.subr.bf16.mxu0 %v579
    %765 = vmatpush2.bf16.msra.mxu0 %v578
    %766 = vmatprep.subr.bf16.mxu0 %v577
    %767 = vmatpush2.bf16.msra.mxu0 %v576
    %768 = vmatprep.subr.bf16.mxu0 %v575
    %769 = vmatpush2.bf16.msra.mxu0 %v574
    %770 = vmatprep.subr.bf16.mxu0 %v573
    %771 = vmatpush2.bf16.msra.mxu0 %v572
    %772 = vmatprep.subr.bf16.mxu0 %v571
    %773 = vmatpush2.bf16.msra.mxu0 %v570
    %774 = vmatprep.subr.bf16.mxu0 %v569
    %775 = vmatpush2.bf16.msra.mxu0 %v568
    %776 = vmatprep.mubr.bf16.mxu0 %v151
    %777 = vmatmul.mubr.bf16.gmra.mxu0 %v150
    %v778 = vpop.f32.mrf.mxu0
    %v779 = vadd.f32 %v257, %v778
    %v780 = vpop.f32.mrf.mxu0
    %v781 = vadd.f32 %v261, %v780
    %v782 = vpop.f32.mrf.mxu0
    %v783 = vpop.f32.mrf.mxu0
    %784 = vdwg.mxu0
    %785 = vmatprep.subr.bf16.mxu0 %v599
    %786 = vmatpush1.bf16.msra.mxu0 %v598
    %787 = vmatprep.subr.bf16.mxu0 %v597
    %788 = vmatpush1.bf16.msra.mxu0 %v596
    %789 = vmatprep.subr.bf16.mxu0 %v595
    %790 = vmatpush1.bf16.msra.mxu0 %v594
    %791 = vmatprep.subr.bf16.mxu0 %v593
    %792 = vmatpush1.bf16.msra.mxu0 %v592
    %793 = vmatprep.subr.bf16.mxu0 %v591
    %794 = vmatpush1.bf16.msra.mxu0 %v590
    %795 = vmatprep.subr.bf16.mxu0 %v589
    %796 = vmatpush1.bf16.msra.mxu0 %v588
    %797 = vmatprep.subr.bf16.mxu0 %v587
    %798 = vmatpush1.bf16.msra.mxu0 %v586
    %799 = vmatprep.subr.bf16.mxu0 %v585
    %800 = vmatpush1.bf16.msra.mxu0 %v584
    %801 = vmatprep.subr.bf16.mxu0 %v615
    %802 = vmatpush2.bf16.msra.mxu0 %v614
    %803 = vmatprep.subr.bf16.mxu0 %v613
    %804 = vmatpush2.bf16.msra.mxu0 %v612
    %805 = vmatprep.subr.bf16.mxu0 %v611
    %806 = vmatpush2.bf16.msra.mxu0 %v610
    %807 = vmatprep.subr.bf16.mxu0 %v609
    %808 = vmatpush2.bf16.msra.mxu0 %v608
    %809 = vmatprep.subr.bf16.mxu0 %v607
    %810 = vmatpush2.bf16.msra.mxu0 %v606
    %811 = vmatprep.subr.bf16.mxu0 %v605
    %812 = vmatpush2.bf16.msra.mxu0 %v604
    %813 = vmatprep.subr.bf16.mxu0 %v603
    %814 = vmatpush2.bf16.msra.mxu0 %v602
    %815 = vmatprep.subr.bf16.mxu0 %v601
    %816 = vmatpush2.bf16.msra.mxu0 %v600
    %817 = vmatprep.mubr.bf16.mxu0 %v153
    %818 = vmatmul.mubr.bf16.gmra.mxu0 %v152
    %v819 = vpop.f32.mrf.mxu0
    %v820 = vadd.f32 %v779, %v819
    %v821 = vpop.f32.mrf.mxu0
    %v822 = vadd.f32 %v781, %v821
    %v823 = vpop.f32.mrf.mxu0
    %v824 = vpop.f32.mrf.mxu0
    %825 = vdwg.mxu0
    %826 = vmatprep.subr.bf16.mxu0 %v631
    %827 = vmatpush1.bf16.msra.mxu0 %v630
    %828 = vmatprep.subr.bf16.mxu0 %v629
    %829 = vmatpush1.bf16.msra.mxu0 %v628
    %830 = vmatprep.subr.bf16.mxu0 %v627
    %831 = vmatpush1.bf16.msra.mxu0 %v626
    %832 = vmatprep.subr.bf16.mxu0 %v625
    %833 = vmatpush1.bf16.msra.mxu0 %v624
    %834 = vmatprep.subr.bf16.mxu0 %v623
    %835 = vmatpush1.bf16.msra.mxu0 %v622
    %836 = vmatprep.subr.bf16.mxu0 %v621
    %837 = vmatpush1.bf16.msra.mxu0 %v620
    %838 = vmatprep.subr.bf16.mxu0 %v619
    %839 = vmatpush1.bf16.msra.mxu0 %v618
    %840 = vmatprep.subr.bf16.mxu0 %v617
    %841 = vmatpush1.bf16.msra.mxu0 %v616
    %842 = vmatprep.subr.bf16.mxu0 %v647
    %843 = vmatpush2.bf16.msra.mxu0 %v646
    %844 = vmatprep.subr.bf16.mxu0 %v645
    %845 = vmatpush2.bf16.msra.mxu0 %v644
    %846 = vmatprep.subr.bf16.mxu0 %v643
    %847 = vmatpush2.bf16.msra.mxu0 %v642
    %848 = vmatprep.subr.bf16.mxu0 %v641
    %849 = vmatpush2.bf16.msra.mxu0 %v640
    %850 = vmatprep.subr.bf16.mxu0 %v639
    %851 = vmatpush2.bf16.msra.mxu0 %v638
    %852 = vmatprep.subr.bf16.mxu0 %v637
    %853 = vmatpush2.bf16.msra.mxu0 %v636
    %854 = vmatprep.subr.bf16.mxu0 %v635
    %855 = vmatpush2.bf16.msra.mxu0 %v634
    %856 = vmatprep.subr.bf16.mxu0 %v633
    %857 = vmatpush2.bf16.msra.mxu0 %v632
    %858 = vmatprep.mubr.bf16.mxu0 %v155
    %859 = vmatmul.mubr.bf16.gmra.mxu0 %v154
    %v860 = vpop.f32.mrf.mxu0
    %v861 = vadd.f32 %v820, %v860
    %v862 = vpop.f32.mrf.mxu0
    %v863 = vadd.f32 %v822, %v862
    %v864 = vpop.f32.mrf.mxu0
    %v865 = vpop.f32.mrf.mxu0
    %866 = vdwg.mxu0
    %v867 = vpack.c.bf16 %v861, %v861
    %v868 = vpack.c.bf16 %v863, %v863
    %v869 = vld [vmem:[#allocation11] sm:$0xff]
    %v870 = vld [vmem:[#allocation11 + $0x8] sm:$0xff]
    %v871 = vld [vmem:[#allocation11 + $0x10] sm:$0xff]
    %v872 = vld [vmem:[#allocation11 + $0x18] sm:$0xff]
    %v873 = vld [vmem:[#allocation11 + $0x20] sm:$0xff]
    %v874 = vld [vmem:[#allocation11 + $0x28] sm:$0xff]
    %v875 = vld [vmem:[#allocation11 + $0x30] sm:$0xff]
    %v876 = vld [vmem:[#allocation11 + $0x38] sm:$0xff]
    %v877 = vld [vmem:[#allocation11 + $0x40] sm:$0xff]
    %v878 = vld [vmem:[#allocation11 + $0x48] sm:$0xff]
    %v879 = vld [vmem:[#allocation11 + $0x50] sm:$0xff]
    %v880 = vld [vmem:[#allocation11 + $0x58] sm:$0xff]
    %v881 = vld [vmem:[#allocation11 + $0x60] sm:$0xff]
    %v882 = vld [vmem:[#allocation11 + $0x68] sm:$0xff]
    %v883 = vld [vmem:[#allocation11 + $0x70] sm:$0xff]
    %v884 = vld [vmem:[#allocation11 + $0x78] sm:$0xff]
    %v885 = vld [vmem:[#allocation11 + $0x80] sm:$0xff]
    %v886 = vld [vmem:[#allocation11 + $0x88] sm:$0xff]
    %v887 = vld [vmem:[#allocation11 + $0x90] sm:$0xff]
    %v888 = vld [vmem:[#allocation11 + $0x98] sm:$0xff]
    %v889 = vld [vmem:[#allocation11 + $0xa0] sm:$0xff]
    %v890 = vld [vmem:[#allocation11 + $0xa8] sm:$0xff]
    %v891 = vld [vmem:[#allocation11 + $0xb0] sm:$0xff]
    %v892 = vld [vmem:[#allocation11 + $0xb8] sm:$0xff]
    %v893 = vld [vmem:[#allocation11 + $0xc0] sm:$0xff]
    %v894 = vld [vmem:[#allocation11 + $0xc8] sm:$0xff]
    %v895 = vld [vmem:[#allocation11 + $0xd0] sm:$0xff]
    %v896 = vld [vmem:[#allocation11 + $0xd8] sm:$0xff]
    %v897 = vld [vmem:[#allocation11 + $0xe0] sm:$0xff]
    %v898 = vld [vmem:[#allocation11 + $0xe8] sm:$0xff]
    %v899 = vld [vmem:[#allocation11 + $0xf0] sm:$0xff]
    %v900 = vld [vmem:[#allocation11 + $0xf8] sm:$0xff]
    %v901 = vld [vmem:[%s7] sm:$0x3]
    %v903 = vlaneseq
    %v904 = vshrl.u32 %v903, 7
    %v905 = vsub.s32 0, %v904
    %v906 = vrot.slane %v901, %v905
    %v907 = vlaneseq
    %v908 = vshrl.u32 %v907, 7
    %v909 = vsub.s32 1, %v908
    %v910 = vrot.slane %v901, %v909
    %v945 = vunpack.c.l.b16 %v869
    %v946 = vunpack.c.h.b16 %v869
    %v947 = vunpack.c.l.b16 %v870
    %v948 = vunpack.c.h.b16 %v870
    %v949 = vunpack.c.l.b16 %v871
    %v950 = vunpack.c.h.b16 %v871
    %v951 = vunpack.c.l.b16 %v872
    %v952 = vunpack.c.h.b16 %v872
    %v953 = vunpack.c.l.b16 %v873
    %v954 = vunpack.c.h.b16 %v873
    %v955 = vunpack.c.l.b16 %v874
    %v956 = vunpack.c.h.b16 %v874
    %v957 = vunpack.c.l.b16 %v875
    %v958 = vunpack.c.h.b16 %v875
    %v959 = vunpack.c.l.b16 %v876
    %v960 = vunpack.c.h.b16 %v876
    %v961 = vunpack.c.l.b16 %v877
    %v962 = vunpack.c.h.b16 %v877
    %v963 = vunpack.c.l.b16 %v878
    %v964 = vunpack.c.h.b16 %v878
    %v965 = vunpack.c.l.b16 %v879
    %v966 = vunpack.c.h.b16 %v879
    %v967 = vunpack.c.l.b16 %v880
    %v968 = vunpack.c.h.b16 %v880
    %v969 = vunpack.c.l.b16 %v881
    %v970 = vunpack.c.h.b16 %v881
    %v971 = vunpack.c.l.b16 %v882
    %v972 = vunpack.c.h.b16 %v882
    %v973 = vunpack.c.l.b16 %v883
    %v974 = vunpack.c.h.b16 %v883
    %v975 = vunpack.c.l.b16 %v884
    %v976 = vunpack.c.h.b16 %v884
    %v977 = vunpack.c.l.b16 %v885
    %v978 = vunpack.c.h.b16 %v885
    %v979 = vunpack.c.l.b16 %v886
    %v980 = vunpack.c.h.b16 %v886
    %v981 = vunpack.c.l.b16 %v887
    %v982 = vunpack.c.h.b16 %v887
    %v983 = vunpack.c.l.b16 %v888
    %v984 = vunpack.c.h.b16 %v888
    %v985 = vunpack.c.l.b16 %v889
    %v986 = vunpack.c.h.b16 %v889
    %v987 = vunpack.c.l.b16 %v890
    %v988 = vunpack.c.h.b16 %v890
    %v989 = vunpack.c.l.b16 %v891
    %v990 = vunpack.c.h.b16 %v891
    %v991 = vunpack.c.l.b16 %v892
    %v992 = vunpack.c.h.b16 %v892
    %v993 = vunpack.c.l.b16 %v893
    %v994 = vunpack.c.h.b16 %v893
    %v995 = vunpack.c.l.b16 %v894
    %v996 = vunpack.c.h.b16 %v894
    %v997 = vunpack.c.l.b16 %v895
    %v998 = vunpack.c.h.b16 %v895
    %v999 = vunpack.c.l.b16 %v896
    %v1000 = vunpack.c.h.b16 %v896
    %v1001 = vunpack.c.l.b16 %v897
    %v1002 = vunpack.c.h.b16 %v897
    %v1003 = vunpack.c.l.b16 %v898
    %v1004 = vunpack.c.h.b16 %v898
    %v1005 = vunpack.c.l.b16 %v899
    %v1006 = vunpack.c.h.b16 %v899
    %v1007 = vunpack.c.l.b16 %v900
    %v1008 = vunpack.c.h.b16 %v900
    %v1009 = vpack.c.b16 %v947, %v945
    %v1010 = vpack.c.b16 %v948, %v946
    %v1011 = vpack.c.b16 %v951, %v949
    %v1012 = vpack.c.b16 %v952, %v950
    %v1013 = vpack.c.b16 %v955, %v953
    %v1014 = vpack.c.b16 %v956, %v954
    %v1015 = vpack.c.b16 %v959, %v957
    %v1016 = vpack.c.b16 %v960, %v958
    %v1017 = vpack.c.b16 %v963, %v961
    %v1018 = vpack.c.b16 %v964, %v962
    %v1019 = vpack.c.b16 %v967, %v965
    %v1020 = vpack.c.b16 %v968, %v966
    %v1021 = vpack.c.b16 %v971, %v969
    %v1022 = vpack.c.b16 %v972, %v970
    %v1023 = vpack.c.b16 %v975, %v973
    %v1024 = vpack.c.b16 %v976, %v974
    %v1025 = vpack.c.b16 %v979, %v977
    %v1026 = vpack.c.b16 %v980, %v978
    %v1027 = vpack.c.b16 %v983, %v981
    %v1028 = vpack.c.b16 %v984, %v982
    %v1029 = vpack.c.b16 %v987, %v985
    %v1030 = vpack.c.b16 %v988, %v986
    %v1031 = vpack.c.b16 %v991, %v989
    %v1032 = vpack.c.b16 %v992, %v990
    %v1033 = vpack.c.b16 %v995, %v993
    %v1034 = vpack.c.b16 %v996, %v994
    %v1035 = vpack.c.b16 %v999, %v997
    %v1036 = vpack.c.b16 %v1000, %v998
    %v1037 = vpack.c.b16 %v1003, %v1001
    %v1038 = vpack.c.b16 %v1004, %v1002
    %v1039 = vpack.c.b16 %v1007, %v1005
    %v1040 = vpack.c.b16 %v1008, %v1006
    %1073 = vmatprep.subr.bf16.mxu0 %v1024
    %1074 = vmatpush1.bf16.msra.mxu0 %v1023
    %1075 = vmatprep.subr.bf16.mxu0 %v1022
    %1076 = vmatpush1.bf16.msra.mxu0 %v1021
    %1077 = vmatprep.subr.bf16.mxu0 %v1020
    %1078 = vmatpush1.bf16.msra.mxu0 %v1019
    %1079 = vmatprep.subr.bf16.mxu0 %v1018
    %1080 = vmatpush1.bf16.msra.mxu0 %v1017
    %1081 = vmatprep.subr.bf16.mxu0 %v1016
    %1082 = vmatpush1.bf16.msra.mxu0 %v1015
    %1083 = vmatprep.subr.bf16.mxu0 %v1014
    %1084 = vmatpush1.bf16.msra.mxu0 %v1013
    %1085 = vmatprep.subr.bf16.mxu0 %v1012
    %1086 = vmatpush1.bf16.msra.mxu0 %v1011
    %1087 = vmatprep.subr.bf16.mxu0 %v1010
    %1088 = vmatpush1.bf16.msra.mxu0 %v1009
    %1089 = vmatprep.subr.bf16.mxu0 %v1040
    %1090 = vmatpush2.bf16.msra.mxu0 %v1039
    %1091 = vmatprep.subr.bf16.mxu0 %v1038
    %1092 = vmatpush2.bf16.msra.mxu0 %v1037
    %1093 = vmatprep.subr.bf16.mxu0 %v1036
    %1094 = vmatpush2.bf16.msra.mxu0 %v1035
    %1095 = vmatprep.subr.bf16.mxu0 %v1034
    %1096 = vmatpush2.bf16.msra.mxu0 %v1033
    %1097 = vmatprep.subr.bf16.mxu0 %v1032
    %1098 = vmatpush2.bf16.msra.mxu0 %v1031
    %1099 = vmatprep.subr.bf16.mxu0 %v1030
    %1100 = vmatpush2.bf16.msra.mxu0 %v1029
    %1101 = vmatprep.subr.bf16.mxu0 %v1028
    %1102 = vmatpush2.bf16.msra.mxu0 %v1027
    %1103 = vmatprep.subr.bf16.mxu0 %v1026
    %1104 = vmatpush2.bf16.msra.mxu0 %v1025
    %1105 = vmatprep.mubr.bf16.mxu0 %v868
    %1106 = vmatmul.mubr.bf16.gmra.mxu0 %v867
    %v1107 = vpop.f32.mrf.mxu0
    %v1108 = vadd.f32 %v906, %v1107
    %v1109 = vpop.f32.mrf.mxu0
    %v1110 = vadd.f32 %v910, %v1109
    %v1111 = vpop.f32.mrf.mxu0
    %v1112 = vpop.f32.mrf.mxu0
    %1113 = vdwg.mxu0
    %v1114 = vld [vmem:[#allocation12] sm:$0xff]
    %v1115 = vld [vmem:[#allocation12 + $0x8] sm:$0xff]
    %v1116 = vld [vmem:[#allocation12 + $0x10] sm:$0xff]
    %v1117 = vld [vmem:[#allocation12 + $0x18] sm:$0xff]
    %v1118 = vld [vmem:[#allocation12 + $0x20] sm:$0xff]
    %v1119 = vld [vmem:[#allocation12 + $0x28] sm:$0xff]
    %v1120 = vld [vmem:[#allocation12 + $0x30] sm:$0xff]
    %v1121 = vld [vmem:[#allocation12 + $0x38] sm:$0xff]
    %v1122 = vld [vmem:[#allocation12 + $0x40] sm:$0xff]
    %v1123 = vld [vmem:[#allocation12 + $0x48] sm:$0xff]
    %v1124 = vld [vmem:[#allocation12 + $0x50] sm:$0xff]
    %v1125 = vld [vmem:[#allocation12 + $0x58] sm:$0xff]
    %v1126 = vld [vmem:[#allocation12 + $0x60] sm:$0xff]
    %v1127 = vld [vmem:[#allocation12 + $0x68] sm:$0xff]
    %v1128 = vld [vmem:[#allocation12 + $0x70] sm:$0xff]
    %v1129 = vld [vmem:[#allocation12 + $0x78] sm:$0xff]
    %v1130 = vld [vmem:[#allocation12 + $0x80] sm:$0xff]
    %v1131 = vld [vmem:[#allocation12 + $0x88] sm:$0xff]
    %v1132 = vld [vmem:[#allocation12 + $0x90] sm:$0xff]
    %v1133 = vld [vmem:[#allocation12 + $0x98] sm:$0xff]
    %v1134 = vld [vmem:[#allocation12 + $0xa0] sm:$0xff]
    %v1135 = vld [vmem:[#allocation12 + $0xa8] sm:$0xff]
    %v1136 = vld [vmem:[#allocation12 + $0xb0] sm:$0xff]
    %v1137 = vld [vmem:[#allocation12 + $0xb8] sm:$0xff]
    %v1138 = vld [vmem:[#allocation12 + $0xc0] sm:$0xff]
    %v1139 = vld [vmem:[#allocation12 + $0xc8] sm:$0xff]
    %v1140 = vld [vmem:[#allocation12 + $0xd0] sm:$0xff]
    %v1141 = vld [vmem:[#allocation12 + $0xd8] sm:$0xff]
    %v1142 = vld [vmem:[#allocation12 + $0xe0] sm:$0xff]
    %v1143 = vld [vmem:[#allocation12 + $0xe8] sm:$0xff]
    %v1144 = vld [vmem:[#allocation12 + $0xf0] sm:$0xff]
    %v1145 = vld [vmem:[#allocation12 + $0xf8] sm:$0xff]
    %v1146 = vld [vmem:[%s9] sm:$0x3]
    %v1148 = vlaneseq
    %v1149 = vshrl.u32 %v1148, 7
    %v1150 = vsub.s32 0, %v1149
    %v1151 = vrot.slane %v1146, %v1150
    %v1152 = vlaneseq
    %v1153 = vshrl.u32 %v1152, 7
    %v1154 = vsub.s32 1, %v1153
    %v1155 = vrot.slane %v1146, %v1154
    %v1190 = vunpack.c.l.b16 %v1114
    %v1191 = vunpack.c.h.b16 %v1114
    %v1192 = vunpack.c.l.b16 %v1115
    %v1193 = vunpack.c.h.b16 %v1115
    %v1194 = vunpack.c.l.b16 %v1116
    %v1195 = vunpack.c.h.b16 %v1116
    %v1196 = vunpack.c.l.b16 %v1117
    %v1197 = vunpack.c.h.b16 %v1117
    %v1198 = vunpack.c.l.b16 %v1118
    %v1199 = vunpack.c.h.b16 %v1118
    %v1200 = vunpack.c.l.b16 %v1119
    %v1201 = vunpack.c.h.b16 %v1119
    %v1202 = vunpack.c.l.b16 %v1120
    %v1203 = vunpack.c.h.b16 %v1120
    %v1204 = vunpack.c.l.b16 %v1121
    %v1205 = vunpack.c.h.b16 %v1121
    %v1206 = vunpack.c.l.b16 %v1122
    %v1207 = vunpack.c.h.b16 %v1122
    %v1208 = vunpack.c.l.b16 %v1123
    %v1209 = vunpack.c.h.b16 %v1123
    %v1210 = vunpack.c.l.b16 %v1124
    %v1211 = vunpack.c.h.b16 %v1124
    %v1212 = vunpack.c.l.b16 %v1125
    %v1213 = vunpack.c.h.b16 %v1125
    %v1214 = vunpack.c.l.b16 %v1126
    %v1215 = vunpack.c.h.b16 %v1126
    %v1216 = vunpack.c.l.b16 %v1127
    %v1217 = vunpack.c.h.b16 %v1127
    %v1218 = vunpack.c.l.b16 %v1128
    %v1219 = vunpack.c.h.b16 %v1128
    %v1220 = vunpack.c.l.b16 %v1129
    %v1221 = vunpack.c.h.b16 %v1129
    %v1222 = vunpack.c.l.b16 %v1130
    %v1223 = vunpack.c.h.b16 %v1130
    %v1224 = vunpack.c.l.b16 %v1131
    %v1225 = vunpack.c.h.b16 %v1131
    %v1226 = vunpack.c.l.b16 %v1132
    %v1227 = vunpack.c.h.b16 %v1132
    %v1228 = vunpack.c.l.b16 %v1133
    %v1229 = vunpack.c.h.b16 %v1133
    %v1230 = vunpack.c.l.b16 %v1134
    %v1231 = vunpack.c.h.b16 %v1134
    %v1232 = vunpack.c.l.b16 %v1135
    %v1233 = vunpack.c.h.b16 %v1135
    %v1234 = vunpack.c.l.b16 %v1136
    %v1235 = vunpack.c.h.b16 %v1136
    %v1236 = vunpack.c.l.b16 %v1137
    %v1237 = vunpack.c.h.b16 %v1137
    %v1238 = vunpack.c.l.b16 %v1138
    %v1239 = vunpack.c.h.b16 %v1138
    %v1240 = vunpack.c.l.b16 %v1139
    %v1241 = vunpack.c.h.b16 %v1139
    %v1242 = vunpack.c.l.b16 %v1140
    %v1243 = vunpack.c.h.b16 %v1140
    %v1244 = vunpack.c.l.b16 %v1141
    %v1245 = vunpack.c.h.b16 %v1141
    %v1246 = vunpack.c.l.b16 %v1142
    %v1247 = vunpack.c.h.b16 %v1142
    %v1248 = vunpack.c.l.b16 %v1143
    %v1249 = vunpack.c.h.b16 %v1143
    %v1250 = vunpack.c.l.b16 %v1144
    %v1251 = vunpack.c.h.b16 %v1144
    %v1252 = vunpack.c.l.b16 %v1145
    %v1253 = vunpack.c.h.b16 %v1145
    %v1254 = vpack.c.b16 %v1192, %v1190
    %v1255 = vpack.c.b16 %v1193, %v1191
    %v1256 = vpack.c.b16 %v1196, %v1194
    %v1257 = vpack.c.b16 %v1197, %v1195
    %v1258 = vpack.c.b16 %v1200, %v1198
    %v1259 = vpack.c.b16 %v1201, %v1199
    %v1260 = vpack.c.b16 %v1204, %v1202
    %v1261 = vpack.c.b16 %v1205, %v1203
    %v1262 = vpack.c.b16 %v1208, %v1206
    %v1263 = vpack.c.b16 %v1209, %v1207
    %v1264 = vpack.c.b16 %v1212, %v1210
    %v1265 = vpack.c.b16 %v1213, %v1211
    %v1266 = vpack.c.b16 %v1216, %v1214
    %v1267 = vpack.c.b16 %v1217, %v1215
    %v1268 = vpack.c.b16 %v1220, %v1218
    %v1269 = vpack.c.b16 %v1221, %v1219
    %v1270 = vpack.c.b16 %v1224, %v1222
    %v1271 = vpack.c.b16 %v1225, %v1223
    %v1272 = vpack.c.b16 %v1228, %v1226
    %v1273 = vpack.c.b16 %v1229, %v1227
    %v1274 = vpack.c.b16 %v1232, %v1230
    %v1275 = vpack.c.b16 %v1233, %v1231
    %v1276 = vpack.c.b16 %v1236, %v1234
    %v1277 = vpack.c.b16 %v1237, %v1235
    %v1278 = vpack.c.b16 %v1240, %v1238
    %v1279 = vpack.c.b16 %v1241, %v1239
    %v1280 = vpack.c.b16 %v1244, %v1242
    %v1281 = vpack.c.b16 %v1245, %v1243
    %v1282 = vpack.c.b16 %v1248, %v1246
    %v1283 = vpack.c.b16 %v1249, %v1247
    %v1284 = vpack.c.b16 %v1252, %v1250
    %v1285 = vpack.c.b16 %v1253, %v1251
    %1318 = vmatprep.subr.bf16.mxu0 %v1269
    %1319 = vmatpush1.bf16.msra.mxu0 %v1268
    %1320 = vmatprep.subr.bf16.mxu0 %v1267
    %1321 = vmatpush1.bf16.msra.mxu0 %v1266
    %1322 = vmatprep.subr.bf16.mxu0 %v1265
    %1323 = vmatpush1.bf16.msra.mxu0 %v1264
    %1324 = vmatprep.subr.bf16.mxu0 %v1263
    %1325 = vmatpush1.bf16.msra.mxu0 %v1262
    %1326 = vmatprep.subr.bf16.mxu0 %v1261
    %1327 = vmatpush1.bf16.msra.mxu0 %v1260
    %1328 = vmatprep.subr.bf16.mxu0 %v1259
    %1329 = vmatpush1.bf16.msra.mxu0 %v1258
    %1330 = vmatprep.subr.bf16.mxu0 %v1257
    %1331 = vmatpush1.bf16.msra.mxu0 %v1256
    %1332 = vmatprep.subr.bf16.mxu0 %v1255
    %1333 = vmatpush1.bf16.msra.mxu0 %v1254
    %1334 = vmatprep.subr.bf16.mxu0 %v1285
    %1335 = vmatpush2.bf16.msra.mxu0 %v1284
    %1336 = vmatprep.subr.bf16.mxu0 %v1283
    %1337 = vmatpush2.bf16.msra.mxu0 %v1282
    %1338 = vmatprep.subr.bf16.mxu0 %v1281
    %1339 = vmatpush2.bf16.msra.mxu0 %v1280
    %1340 = vmatprep.subr.bf16.mxu0 %v1279
    %1341 = vmatpush2.bf16.msra.mxu0 %v1278
    %1342 = vmatprep.subr.bf16.mxu0 %v1277
    %1343 = vmatpush2.bf16.msra.mxu0 %v1276
    %1344 = vmatprep.subr.bf16.mxu0 %v1275
    %1345 = vmatpush2.bf16.msra.mxu0 %v1274
    %1346 = vmatprep.subr.bf16.mxu0 %v1273
    %1347 = vmatpush2.bf16.msra.mxu0 %v1272
    %1348 = vmatprep.subr.bf16.mxu0 %v1271
    %1349 = vmatpush2.bf16.msra.mxu0 %v1270
    %1350 = vmatprep.mubr.bf16.mxu0 %v868
    %1351 = vmatmul.mubr.bf16.gmra.mxu0 %v867
    %v1352 = vpop.f32.mrf.mxu0
    %v1353 = vadd.f32 %v1151, %v1352
    %v1354 = vpop.f32.mrf.mxu0
    %v1355 = vadd.f32 %v1155, %v1354
    %v1356 = vpop.f32.mrf.mxu0
    %v1357 = vpop.f32.mrf.mxu0
    %1358 = vdwg.mxu0
    %s1359 = sld [smem:[#allocation3 + %s143]]
    %s1360 = sshra.s32 %s1359, 3
    %s1361 = sand.u32 %s1359, 7
    %s1362 = sshra.s32 %s1359, 3
    %s1363 = sand.u32 %s1359, 7
    %s1364 = smul.u32 %s1360, 2
    %s1365 = smul.u32 %s1364, 8
    %s1366 = sadd.s32 %s1365, %s1363
    %s1367 = scalar_lea.vmem [#allocation14], %s1366
    %v1368 = vld [vmem:[%s1367] ss:$8 sm:$0x3]
    %s1369 = sadd.s32 %s143, 1
    %s1370 = sld [smem:[#allocation3 + %s1369]]
    %s1371 = sshra.s32 %s1370, 3
    %s1372 = sand.u32 %s1370, 7
    %s1373 = sshra.s32 %s1370, 3
    %s1374 = sand.u32 %s1370, 7
    %s1375 = smul.u32 %s1371, 2
    %s1376 = smul.u32 %s1375, 8
    %s1377 = sadd.s32 %s1376, %s1374
    %s1378 = scalar_lea.vmem [#allocation14], %s1377
    %v1379 = vld [vmem:[%s1378] ss:$8 sm:$0x3]
    %s1380 = sadd.s32 %s143, 2
    %s1381 = sld [smem:[#allocation3 + %s1380]]
    %s1382 = sshra.s32 %s1381, 3
    %s1383 = sand.u32 %s1381, 7
    %s1384 = sshra.s32 %s1381, 3
    %s1385 = sand.u32 %s1381, 7
    %s1386 = smul.u32 %s1382, 2
    %s1387 = smul.u32 %s1386, 8
    %s1388 = sadd.s32 %s1387, %s1385
    %s1389 = scalar_lea.vmem [#allocation14], %s1388
    %v1390 = vld [vmem:[%s1389] ss:$8 sm:$0x3]
    %s1391 = sadd.s32 %s143, 3
    %s1392 = sld [smem:[#allocation3 + %s1391]]
    %s1393 = sshra.s32 %s1392, 3
    %s1394 = sand.u32 %s1392, 7
    %s1395 = sshra.s32 %s1392, 3
    %s1396 = sand.u32 %s1392, 7
    %s1397 = smul.u32 %s1393, 2
    %s1398 = smul.u32 %s1397, 8
    %s1399 = sadd.s32 %s1398, %s1396
    %s1400 = scalar_lea.vmem [#allocation14], %s1399
    %v1401 = vld [vmem:[%s1400] ss:$8 sm:$0x3]
    %s1402 = sadd.s32 %s143, 4
    %s1403 = sld [smem:[#allocation3 + %s1402]]
    %s1404 = sshra.s32 %s1403, 3
    %s1405 = sand.u32 %s1403, 7
    %s1406 = sshra.s32 %s1403, 3
    %s1407 = sand.u32 %s1403, 7
    %s1408 = smul.u32 %s1404, 2
    %s1409 = smul.u32 %s1408, 8
    %s1410 = sadd.s32 %s1409, %s1407
    %s1411 = scalar_lea.vmem [#allocation14], %s1410
    %v1412 = vld [vmem:[%s1411] ss:$8 sm:$0x3]
    %s1413 = sadd.s32 %s143, 5
    %s1414 = sld [smem:[#allocation3 + %s1413]]
    %s1415 = sshra.s32 %s1414, 3
    %s1416 = sand.u32 %s1414, 7
    %s1417 = sshra.s32 %s1414, 3
    %s1418 = sand.u32 %s1414, 7
    %s1419 = smul.u32 %s1415, 2
    %s1420 = smul.u32 %s1419, 8
    %s1421 = sadd.s32 %s1420, %s1418
    %s1422 = scalar_lea.vmem [#allocation14], %s1421
    %v1423 = vld [vmem:[%s1422] ss:$8 sm:$0x3]
    %s1424 = sadd.s32 %s143, 6
    %s1425 = sld [smem:[#allocation3 + %s1424]]
    %s1426 = sshra.s32 %s1425, 3
    %s1427 = sand.u32 %s1425, 7
    %s1428 = sshra.s32 %s1425, 3
    %s1429 = sand.u32 %s1425, 7
    %s1430 = smul.u32 %s1426, 2
    %s1431 = smul.u32 %s1430, 8
    %s1432 = sadd.s32 %s1431, %s1429
    %s1433 = scalar_lea.vmem [#allocation14], %s1432
    %v1434 = vld [vmem:[%s1433] ss:$8 sm:$0x3]
    %s1435 = sadd.s32 %s143, 7
    %s1436 = sld [smem:[#allocation3 + %s1435]]
    %s1437 = sshra.s32 %s1436, 3
    %s1438 = sand.u32 %s1436, 7
    %s1439 = sshra.s32 %s1436, 3
    %s1440 = sand.u32 %s1436, 7
    %s1441 = smul.u32 %s1437, 2
    %s1442 = smul.u32 %s1441, 8
    %s1443 = sadd.s32 %s1442, %s1440
    %s1444 = scalar_lea.vmem [#allocation14], %s1443
    %v1445 = vld [vmem:[%s1444] ss:$8 sm:$0x3]
    %v1447 = vlaneseq
    %v1448 = vshrl.u32 %v1447, 7
    %v1449 = vsub.s32 0, %v1448
    %v1450 = vrot.slane %v1368, %v1449
    %v1451 = vlaneseq
    %v1452 = vshrl.u32 %v1451, 7
    %v1453 = vsub.s32 1, %v1452
    %v1454 = vrot.slane %v1368, %v1453
    %v1458 = vlaneseq
    %v1459 = vshrl.u32 %v1458, 7
    %v1460 = vsub.s32 0, %v1459
    %v1461 = vrot.slane %v1379, %v1460
    %v1462 = vlaneseq
    %v1463 = vshrl.u32 %v1462, 7
    %v1464 = vsub.s32 1, %v1463
    %v1465 = vrot.slane %v1379, %v1464
    %v1469 = vlaneseq
    %v1470 = vshrl.u32 %v1469, 7
    %v1471 = vsub.s32 0, %v1470
    %v1472 = vrot.slane %v1390, %v1471
    %v1473 = vlaneseq
    %v1474 = vshrl.u32 %v1473, 7
    %v1475 = vsub.s32 1, %v1474
    %v1476 = vrot.slane %v1390, %v1475
    %v1480 = vlaneseq
    %v1481 = vshrl.u32 %v1480, 7
    %v1482 = vsub.s32 0, %v1481
    %v1483 = vrot.slane %v1401, %v1482
    %v1484 = vlaneseq
    %v1485 = vshrl.u32 %v1484, 7
    %v1486 = vsub.s32 1, %v1485
    %v1487 = vrot.slane %v1401, %v1486
    %v1491 = vlaneseq
    %v1492 = vshrl.u32 %v1491, 7
    %v1493 = vsub.s32 0, %v1492
    %v1494 = vrot.slane %v1412, %v1493
    %v1495 = vlaneseq
    %v1496 = vshrl.u32 %v1495, 7
    %v1497 = vsub.s32 1, %v1496
    %v1498 = vrot.slane %v1412, %v1497
    %v1502 = vlaneseq
    %v1503 = vshrl.u32 %v1502, 7
    %v1504 = vsub.s32 0, %v1503
    %v1505 = vrot.slane %v1423, %v1504
    %v1506 = vlaneseq
    %v1507 = vshrl.u32 %v1506, 7
    %v1508 = vsub.s32 1, %v1507
    %v1509 = vrot.slane %v1423, %v1508
    %v1513 = vlaneseq
    %v1514 = vshrl.u32 %v1513, 7
    %v1515 = vsub.s32 0, %v1514
    %v1516 = vrot.slane %v1434, %v1515
    %v1517 = vlaneseq
    %v1518 = vshrl.u32 %v1517, 7
    %v1519 = vsub.s32 1, %v1518
    %v1520 = vrot.slane %v1434, %v1519
    %v1524 = vlaneseq
    %v1525 = vshrl.u32 %v1524, 7
    %v1526 = vsub.s32 0, %v1525
    %v1527 = vrot.slane %v1445, %v1526
    %v1528 = vlaneseq
    %v1529 = vshrl.u32 %v1528, 7
    %v1530 = vsub.s32 1, %v1529
    %v1531 = vrot.slane %v1445, %v1530
    %vm1534 = vcmask 1040384
    %v1535 = vsel %vm1534, %v1450, %v1461
    %v1536 = vsel %vm1534, %v1454, %v1465
    %vm1537 = vcmask 1041408
    %v1538 = vsel %vm1537, %v1535, %v1472
    %v1539 = vsel %vm1537, %v1536, %v1476
    %vm1540 = vcmask 1042432
    %v1541 = vsel %vm1540, %v1538, %v1483
    %v1542 = vsel %vm1540, %v1539, %v1487
    %vm1543 = vcmask 1043456
    %v1544 = vsel %vm1543, %v1541, %v1494
    %v1545 = vsel %vm1543, %v1542, %v1498
    %vm1546 = vcmask 1044480
    %v1547 = vsel %vm1546, %v1544, %v1505
    %v1548 = vsel %vm1546, %v1545, %v1509
    %vm1549 = vcmask 1045504
    %v1550 = vsel %vm1549, %v1547, %v1516
    %v1551 = vsel %vm1549, %v1548, %v1520
    %vm1552 = vcmask 1046528
    %v1553 = vsel %vm1552, %v1550, %v1527
    %v1554 = vsel %vm1552, %v1551, %v1531
    %s1555 = sld [smem:[#allocation4 + %s143]]
    %s1556 = sshra.s32 %s1555, 3
    %s1557 = sand.u32 %s1555, 7
    %s1558 = sshra.s32 %s1555, 3
    %s1559 = sand.u32 %s1555, 7
    %s1560 = smul.u32 %s1556, 2
    %s1561 = smul.u32 %s1560, 8
    %s1562 = sadd.s32 %s1561, %s1559
    %s1563 = scalar_lea.vmem [#allocation14], %s1562
    %v1564 = vld [vmem:[%s1563] ss:$8 sm:$0x3]
    %s1565 = sld [smem:[#allocation4 + %s1369]]
    %s1566 = sshra.s32 %s1565, 3
    %s1567 = sand.u32 %s1565, 7
    %s1568 = sshra.s32 %s1565, 3
    %s1569 = sand.u32 %s1565, 7
    %s1570 = smul.u32 %s1566, 2
    %s1571 = smul.u32 %s1570, 8
    %s1572 = sadd.s32 %s1571, %s1569
    %s1573 = scalar_lea.vmem [#allocation14], %s1572
    %v1574 = vld [vmem:[%s1573] ss:$8 sm:$0x3]
    %s1575 = sld [smem:[#allocation4 + %s1380]]
    %s1576 = sshra.s32 %s1575, 3
    %s1577 = sand.u32 %s1575, 7
    %s1578 = sshra.s32 %s1575, 3
    %s1579 = sand.u32 %s1575, 7
    %s1580 = smul.u32 %s1576, 2
    %s1581 = smul.u32 %s1580, 8
    %s1582 = sadd.s32 %s1581, %s1579
    %s1583 = scalar_lea.vmem [#allocation14], %s1582
    %v1584 = vld [vmem:[%s1583] ss:$8 sm:$0x3]
    %s1585 = sld [smem:[#allocation4 + %s1391]]
    %s1586 = sshra.s32 %s1585, 3
    %s1587 = sand.u32 %s1585, 7
    %s1588 = sshra.s32 %s1585, 3
    %s1589 = sand.u32 %s1585, 7
    %s1590 = smul.u32 %s1586, 2
    %s1591 = smul.u32 %s1590, 8
    %s1592 = sadd.s32 %s1591, %s1589
    %s1593 = scalar_lea.vmem [#allocation14], %s1592
    %v1594 = vld [vmem:[%s1593] ss:$8 sm:$0x3]
    %s1595 = sld [smem:[#allocation4 + %s1402]]
    %s1596 = sshra.s32 %s1595, 3
    %s1597 = sand.u32 %s1595, 7
    %s1598 = sshra.s32 %s1595, 3
    %s1599 = sand.u32 %s1595, 7
    %s1600 = smul.u32 %s1596, 2
    %s1601 = smul.u32 %s1600, 8
    %s1602 = sadd.s32 %s1601, %s1599
    %s1603 = scalar_lea.vmem [#allocation14], %s1602
    %v1604 = vld [vmem:[%s1603] ss:$8 sm:$0x3]
    %s1605 = sld [smem:[#allocation4 + %s1413]]
    %s1606 = sshra.s32 %s1605, 3
    %s1607 = sand.u32 %s1605, 7
    %s1608 = sshra.s32 %s1605, 3
    %s1609 = sand.u32 %s1605, 7
    %s1610 = smul.u32 %s1606, 2
    %s1611 = smul.u32 %s1610, 8
    %s1612 = sadd.s32 %s1611, %s1609
    %s1613 = scalar_lea.vmem [#allocation14], %s1612
    %v1614 = vld [vmem:[%s1613] ss:$8 sm:$0x3]
    %s1615 = sld [smem:[#allocation4 + %s1424]]
    %s1616 = sshra.s32 %s1615, 3
    %s1617 = sand.u32 %s1615, 7
    %s1618 = sshra.s32 %s1615, 3
    %s1619 = sand.u32 %s1615, 7
    %s1620 = smul.u32 %s1616, 2
    %s1621 = smul.u32 %s1620, 8
    %s1622 = sadd.s32 %s1621, %s1619
    %s1623 = scalar_lea.vmem [#allocation14], %s1622
    %v1624 = vld [vmem:[%s1623] ss:$8 sm:$0x3]
    %s1625 = sld [smem:[#allocation4 + %s1435]]
    %s1626 = sshra.s32 %s1625, 3
    %s1627 = sand.u32 %s1625, 7
    %s1628 = sshra.s32 %s1625, 3
    %s1629 = sand.u32 %s1625, 7
    %s1630 = smul.u32 %s1626, 2
    %s1631 = smul.u32 %s1630, 8
    %s1632 = sadd.s32 %s1631, %s1629
    %s1633 = scalar_lea.vmem [#allocation14], %s1632
    %v1634 = vld [vmem:[%s1633] ss:$8 sm:$0x3]
    %v1636 = vlaneseq
    %v1637 = vshrl.u32 %v1636, 7
    %v1638 = vsub.s32 0, %v1637
    %v1639 = vrot.slane %v1564, %v1638
    %v1640 = vlaneseq
    %v1641 = vshrl.u32 %v1640, 7
    %v1642 = vsub.s32 1, %v1641
    %v1643 = vrot.slane %v1564, %v1642
    %v1647 = vlaneseq
    %v1648 = vshrl.u32 %v1647, 7
    %v1649 = vsub.s32 0, %v1648
    %v1650 = vrot.slane %v1574, %v1649
    %v1651 = vlaneseq
    %v1652 = vshrl.u32 %v1651, 7
    %v1653 = vsub.s32 1, %v1652
    %v1654 = vrot.slane %v1574, %v1653
    %v1658 = vlaneseq
    %v1659 = vshrl.u32 %v1658, 7
    %v1660 = vsub.s32 0, %v1659
    %v1661 = vrot.slane %v1584, %v1660
    %v1662 = vlaneseq
    %v1663 = vshrl.u32 %v1662, 7
    %v1664 = vsub.s32 1, %v1663
    %v1665 = vrot.slane %v1584, %v1664
    %v1669 = vlaneseq
    %v1670 = vshrl.u32 %v1669, 7
    %v1671 = vsub.s32 0, %v1670
    %v1672 = vrot.slane %v1594, %v1671
    %v1673 = vlaneseq
    %v1674 = vshrl.u32 %v1673, 7
    %v1675 = vsub.s32 1, %v1674
    %v1676 = vrot.slane %v1594, %v1675
    %v1680 = vlaneseq
    %v1681 = vshrl.u32 %v1680, 7
    %v1682 = vsub.s32 0, %v1681
    %v1683 = vrot.slane %v1604, %v1682
    %v1684 = vlaneseq
    %v1685 = vshrl.u32 %v1684, 7
    %v1686 = vsub.s32 1, %v1685
    %v1687 = vrot.slane %v1604, %v1686
    %v1691 = vlaneseq
    %v1692 = vshrl.u32 %v1691, 7
    %v1693 = vsub.s32 0, %v1692
    %v1694 = vrot.slane %v1614, %v1693
    %v1695 = vlaneseq
    %v1696 = vshrl.u32 %v1695, 7
    %v1697 = vsub.s32 1, %v1696
    %v1698 = vrot.slane %v1614, %v1697
    %v1702 = vlaneseq
    %v1703 = vshrl.u32 %v1702, 7
    %v1704 = vsub.s32 0, %v1703
    %v1705 = vrot.slane %v1624, %v1704
    %v1706 = vlaneseq
    %v1707 = vshrl.u32 %v1706, 7
    %v1708 = vsub.s32 1, %v1707
    %v1709 = vrot.slane %v1624, %v1708
    %v1713 = vlaneseq
    %v1714 = vshrl.u32 %v1713, 7
    %v1715 = vsub.s32 0, %v1714
    %v1716 = vrot.slane %v1634, %v1715
    %v1717 = vlaneseq
    %v1718 = vshrl.u32 %v1717, 7
    %v1719 = vsub.s32 1, %v1718
    %v1720 = vrot.slane %v1634, %v1719
    %v1723 = vsel %vm1534, %v1639, %v1650
    %v1724 = vsel %vm1534, %v1643, %v1654
    %v1725 = vsel %vm1537, %v1723, %v1661
    %v1726 = vsel %vm1537, %v1724, %v1665
    %v1727 = vsel %vm1540, %v1725, %v1672
    %v1728 = vsel %vm1540, %v1726, %v1676
    %v1729 = vsel %vm1543, %v1727, %v1683
    %v1730 = vsel %vm1543, %v1728, %v1687
    %v1731 = vsel %vm1546, %v1729, %v1694
    %v1732 = vsel %vm1546, %v1730, %v1698
    %v1733 = vsel %vm1549, %v1731, %v1705
    %v1734 = vsel %vm1549, %v1732, %v1709
    %v1735 = vsel %vm1552, %v1733, %v1716
    %v1736 = vsel %vm1552, %v1734, %v1720
    %s1737 = sld [smem:[#allocation5 + %s143]]
    %s1738 = sshra.s32 %s1737, 3
    %s1739 = sand.u32 %s1737, 7
    %s1740 = sshra.s32 %s1737, 3
    %s1741 = sand.u32 %s1737, 7
    %s1742 = smul.u32 %s1738, 2
    %s1743 = smul.u32 %s1742, 8
    %s1744 = sadd.s32 %s1743, %s1741
    %s1745 = scalar_lea.vmem [#allocation14], %s1744
    %v1746 = vld [vmem:[%s1745] ss:$8 sm:$0x3]
    %s1747 = sld [smem:[#allocation5 + %s1369]]
    %s1748 = sshra.s32 %s1747, 3
    %s1749 = sand.u32 %s1747, 7
    %s1750 = sshra.s32 %s1747, 3
    %s1751 = sand.u32 %s1747, 7
    %s1752 = smul.u32 %s1748, 2
    %s1753 = smul.u32 %s1752, 8
    %s1754 = sadd.s32 %s1753, %s1751
    %s1755 = scalar_lea.vmem [#allocation14], %s1754
    %v1756 = vld [vmem:[%s1755] ss:$8 sm:$0x3]
    %s1757 = sld [smem:[#allocation5 + %s1380]]
    %s1758 = sshra.s32 %s1757, 3
    %s1759 = sand.u32 %s1757, 7
    %s1760 = sshra.s32 %s1757, 3
    %s1761 = sand.u32 %s1757, 7
    %s1762 = smul.u32 %s1758, 2
    %s1763 = smul.u32 %s1762, 8
    %s1764 = sadd.s32 %s1763, %s1761
    %s1765 = scalar_lea.vmem [#allocation14], %s1764
    %v1766 = vld [vmem:[%s1765] ss:$8 sm:$0x3]
    %s1767 = sld [smem:[#allocation5 + %s1391]]
    %s1768 = sshra.s32 %s1767, 3
    %s1769 = sand.u32 %s1767, 7
    %s1770 = sshra.s32 %s1767, 3
    %s1771 = sand.u32 %s1767, 7
    %s1772 = smul.u32 %s1768, 2
    %s1773 = smul.u32 %s1772, 8
    %s1774 = sadd.s32 %s1773, %s1771
    %s1775 = scalar_lea.vmem [#allocation14], %s1774
    %v1776 = vld [vmem:[%s1775] ss:$8 sm:$0x3]
    %s1777 = sld [smem:[#allocation5 + %s1402]]
    %s1778 = sshra.s32 %s1777, 3
    %s1779 = sand.u32 %s1777, 7
    %s1780 = sshra.s32 %s1777, 3
    %s1781 = sand.u32 %s1777, 7
    %s1782 = smul.u32 %s1778, 2
    %s1783 = smul.u32 %s1782, 8
    %s1784 = sadd.s32 %s1783, %s1781
    %s1785 = scalar_lea.vmem [#allocation14], %s1784
    %v1786 = vld [vmem:[%s1785] ss:$8 sm:$0x3]
    %s1787 = sld [smem:[#allocation5 + %s1413]]
    %s1788 = sshra.s32 %s1787, 3
    %s1789 = sand.u32 %s1787, 7
    %s1790 = sshra.s32 %s1787, 3
    %s1791 = sand.u32 %s1787, 7
    %s1792 = smul.u32 %s1788, 2
    %s1793 = smul.u32 %s1792, 8
    %s1794 = sadd.s32 %s1793, %s1791
    %s1795 = scalar_lea.vmem [#allocation14], %s1794
    %v1796 = vld [vmem:[%s1795] ss:$8 sm:$0x3]
    %s1797 = sld [smem:[#allocation5 + %s1424]]
    %s1798 = sshra.s32 %s1797, 3
    %s1799 = sand.u32 %s1797, 7
    %s1800 = sshra.s32 %s1797, 3
    %s1801 = sand.u32 %s1797, 7
    %s1802 = smul.u32 %s1798, 2
    %s1803 = smul.u32 %s1802, 8
    %s1804 = sadd.s32 %s1803, %s1801
    %s1805 = scalar_lea.vmem [#allocation14], %s1804
    %v1806 = vld [vmem:[%s1805] ss:$8 sm:$0x3]
    %s1807 = sld [smem:[#allocation5 + %s1435]]
    %s1808 = sshra.s32 %s1807, 3
    %s1809 = sand.u32 %s1807, 7
    %s1810 = sshra.s32 %s1807, 3
    %s1811 = sand.u32 %s1807, 7
    %s1812 = smul.u32 %s1808, 2
    %s1813 = smul.u32 %s1812, 8
    %s1814 = sadd.s32 %s1813, %s1811
    %s1815 = scalar_lea.vmem [#allocation14], %s1814
    %v1816 = vld [vmem:[%s1815] ss:$8 sm:$0x3]
    %v1818 = vlaneseq
    %v1819 = vshrl.u32 %v1818, 7
    %v1820 = vsub.s32 0, %v1819
    %v1821 = vrot.slane %v1746, %v1820
    %v1822 = vlaneseq
    %v1823 = vshrl.u32 %v1822, 7
    %v1824 = vsub.s32 1, %v1823
    %v1825 = vrot.slane %v1746, %v1824
    %v1829 = vlaneseq
    %v1830 = vshrl.u32 %v1829, 7
    %v1831 = vsub.s32 0, %v1830
    %v1832 = vrot.slane %v1756, %v1831
    %v1833 = vlaneseq
    %v1834 = vshrl.u32 %v1833, 7
    %v1835 = vsub.s32 1, %v1834
    %v1836 = vrot.slane %v1756, %v1835
    %v1840 = vlaneseq
    %v1841 = vshrl.u32 %v1840, 7
    %v1842 = vsub.s32 0, %v1841
    %v1843 = vrot.slane %v1766, %v1842
    %v1844 = vlaneseq
    %v1845 = vshrl.u32 %v1844, 7
    %v1846 = vsub.s32 1, %v1845
    %v1847 = vrot.slane %v1766, %v1846
    %v1851 = vlaneseq
    %v1852 = vshrl.u32 %v1851, 7
    %v1853 = vsub.s32 0, %v1852
    %v1854 = vrot.slane %v1776, %v1853
    %v1855 = vlaneseq
    %v1856 = vshrl.u32 %v1855, 7
    %v1857 = vsub.s32 1, %v1856
    %v1858 = vrot.slane %v1776, %v1857
    %v1862 = vlaneseq
    %v1863 = vshrl.u32 %v1862, 7
    %v1864 = vsub.s32 0, %v1863
    %v1865 = vrot.slane %v1786, %v1864
    %v1866 = vlaneseq
    %v1867 = vshrl.u32 %v1866, 7
    %v1868 = vsub.s32 1, %v1867
    %v1869 = vrot.slane %v1786, %v1868
    %v1873 = vlaneseq
    %v1874 = vshrl.u32 %v1873, 7
    %v1875 = vsub.s32 0, %v1874
    %v1876 = vrot.slane %v1796, %v1875
    %v1877 = vlaneseq
    %v1878 = vshrl.u32 %v1877, 7
    %v1879 = vsub.s32 1, %v1878
    %v1880 = vrot.slane %v1796, %v1879
    %v1884 = vlaneseq
    %v1885 = vshrl.u32 %v1884, 7
    %v1886 = vsub.s32 0, %v1885
    %v1887 = vrot.slane %v1806, %v1886
    %v1888 = vlaneseq
    %v1889 = vshrl.u32 %v1888, 7
    %v1890 = vsub.s32 1, %v1889
    %v1891 = vrot.slane %v1806, %v1890
    %v1895 = vlaneseq
    %v1896 = vshrl.u32 %v1895, 7
    %v1897 = vsub.s32 0, %v1896
    %v1898 = vrot.slane %v1816, %v1897
    %v1899 = vlaneseq
    %v1900 = vshrl.u32 %v1899, 7
    %v1901 = vsub.s32 1, %v1900
    %v1902 = vrot.slane %v1816, %v1901
    %v1905 = vsel %vm1534, %v1821, %v1832
    %v1906 = vsel %vm1534, %v1825, %v1836
    %v1907 = vsel %vm1537, %v1905, %v1843
    %v1908 = vsel %vm1537, %v1906, %v1847
    %v1909 = vsel %vm1540, %v1907, %v1854
    %v1910 = vsel %vm1540, %v1908, %v1858
    %v1911 = vsel %vm1543, %v1909, %v1865
    %v1912 = vsel %vm1543, %v1910, %v1869
    %v1913 = vsel %vm1546, %v1911, %v1876
    %v1914 = vsel %vm1546, %v1912, %v1880
    %v1915 = vsel %vm1549, %v1913, %v1887
    %v1916 = vsel %vm1549, %v1914, %v1891
    %v1917 = vsel %vm1552, %v1915, %v1898
    %v1918 = vsel %vm1552, %v1916, %v1902
    %v1919 = vmul.f32 %v1553, %v1735
    %v1920 = vmul.f32 %v1554, %v1736
    %v1921 = vmul.f32 %v1554, %v1735
    %v1922 = vmul.f32 %v1553, %v1736
    %v1923 = vsub.f32 %v1919, %v1920
    %v1924 = vmul.f32 %v1108, %v1923
    %v1925 = vsub.f32 %v1922, %v1921
    %v1926 = vmul.f32 %v1110, %v1925
    %v1927 = vadd.f32 %v1924, %v1926
    %v1928 = vadd.f32 %v1921, %v1922
    %v1929 = vmul.f32 %v1108, %v1928
    %v1930 = vadd.f32 %v1919, %v1920
    %v1931 = vmul.f32 %v1110, %v1930
    %v1932 = vsub.f32 %v1929, %v1931
    %v1933 = vpack.c.bf16 %v1927, %v1927
    %v1934 = vpack.c.bf16 %v1932, %v1932
    %v1935 = vld [vmem:[#allocation17] sm:$0xf]
    %v1936 = vld [vmem:[#allocation17 + $0x4] sm:$0xf]
    %v1937 = vld [vmem:[#allocation17 + $0x8] sm:$0xf]
    %v1938 = vld [vmem:[#allocation17 + $0xc] sm:$0xf]
    %v1939 = vld [vmem:[#allocation17 + $0x10] sm:$0xf]
    %v1940 = vld [vmem:[#allocation17 + $0x14] sm:$0xf]
    %v1941 = vld [vmem:[#allocation17 + $0x18] sm:$0xf]
    %v1942 = vld [vmem:[#allocation17 + $0x1c] sm:$0xf]
    %v1943 = vld [vmem:[#allocation17 + $0x20] sm:$0xf]
    %v1944 = vld [vmem:[#allocation17 + $0x24] sm:$0xf]
    %v1945 = vld [vmem:[#allocation17 + $0x28] sm:$0xf]
    %v1946 = vld [vmem:[#allocation17 + $0x2c] sm:$0xf]
    %v1947 = vld [vmem:[#allocation17 + $0x30] sm:$0xf]
    %v1948 = vld [vmem:[#allocation17 + $0x34] sm:$0xf]
    %v1949 = vld [vmem:[#allocation17 + $0x38] sm:$0xf]
    %v1950 = vld [vmem:[#allocation17 + $0x3c] sm:$0xf]
    %v1951 = vld [vmem:[#allocation17 + $0x40] sm:$0xf]
    %v1952 = vld [vmem:[#allocation17 + $0x44] sm:$0xf]
    %v1953 = vld [vmem:[#allocation17 + $0x48] sm:$0xf]
    %v1954 = vld [vmem:[#allocation17 + $0x4c] sm:$0xf]
    %v1955 = vld [vmem:[#allocation17 + $0x50] sm:$0xf]
    %v1956 = vld [vmem:[#allocation17 + $0x54] sm:$0xf]
    %v1957 = vld [vmem:[#allocation17 + $0x58] sm:$0xf]
    %v1958 = vld [vmem:[#allocation17 + $0x5c] sm:$0xf]
    %v1959 = vld [vmem:[#allocation17 + $0x60] sm:$0xf]
    %v1960 = vld [vmem:[#allocation17 + $0x64] sm:$0xf]
    %v1961 = vld [vmem:[#allocation17 + $0x68] sm:$0xf]
    %v1962 = vld [vmem:[#allocation17 + $0x6c] sm:$0xf]
    %v1963 = vld [vmem:[#allocation17 + $0x70] sm:$0xf]
    %v1964 = vld [vmem:[#allocation17 + $0x74] sm:$0xf]
    %v1965 = vld [vmem:[#allocation17 + $0x78] sm:$0xf]
    %v1966 = vld [vmem:[#allocation17 + $0x7c] sm:$0xf]
    %v1999 = vunpack.c.l.b16 %v1935
    %v2000 = vunpack.c.l.b16 %v1936
    %v2001 = vunpack.c.l.b16 %v1937
    %v2002 = vunpack.c.l.b16 %v1938
    %v2003 = vunpack.c.l.b16 %v1939
    %v2004 = vunpack.c.l.b16 %v1940
    %v2005 = vunpack.c.l.b16 %v1941
    %v2006 = vunpack.c.l.b16 %v1942
    %v2007 = vunpack.c.l.b16 %v1943
    %v2008 = vunpack.c.l.b16 %v1944
    %v2009 = vunpack.c.l.b16 %v1945
    %v2010 = vunpack.c.l.b16 %v1946
    %v2011 = vunpack.c.l.b16 %v1947
    %v2012 = vunpack.c.l.b16 %v1948
    %v2013 = vunpack.c.l.b16 %v1949
    %v2014 = vunpack.c.l.b16 %v1950
    %v2015 = vunpack.c.l.b16 %v1951
    %v2016 = vunpack.c.l.b16 %v1952
    %v2017 = vunpack.c.l.b16 %v1953
    %v2018 = vunpack.c.l.b16 %v1954
    %v2019 = vunpack.c.l.b16 %v1955
    %v2020 = vunpack.c.l.b16 %v1956
    %v2021 = vunpack.c.l.b16 %v1957
    %v2022 = vunpack.c.l.b16 %v1958
    %v2023 = vunpack.c.l.b16 %v1959
    %v2024 = vunpack.c.l.b16 %v1960
    %v2025 = vunpack.c.l.b16 %v1961
    %v2026 = vunpack.c.l.b16 %v1962
    %v2027 = vunpack.c.l.b16 %v1963
    %v2028 = vunpack.c.l.b16 %v1964
    %v2029 = vunpack.c.l.b16 %v1965
    %v2030 = vunpack.c.l.b16 %v1966
    %v2031 = vpack.c.b16 %v2000, %v1999
    %v2032 = vpack.c.b16 %v2002, %v2001
    %v2033 = vpack.c.b16 %v2004, %v2003
    %v2034 = vpack.c.b16 %v2006, %v2005
    %v2035 = vpack.c.b16 %v2008, %v2007
    %v2036 = vpack.c.b16 %v2010, %v2009
    %v2037 = vpack.c.b16 %v2012, %v2011
    %v2038 = vpack.c.b16 %v2014, %v2013
    %v2039 = vpack.c.b16 %v2016, %v2015
    %v2040 = vpack.c.b16 %v2018, %v2017
    %v2041 = vpack.c.b16 %v2020, %v2019
    %v2042 = vpack.c.b16 %v2022, %v2021
    %v2043 = vpack.c.b16 %v2024, %v2023
    %v2044 = vpack.c.b16 %v2026, %v2025
    %v2045 = vpack.c.b16 %v2028, %v2027
    %v2046 = vpack.c.b16 %v2030, %v2029
    %2063 = vmatprep.subr.bf16.mxu0 0
    %2064 = vmatpush1.bf16.msra.mxu0 %v2038
    %2065 = vmatprep.subr.bf16.mxu0 0
    %2066 = vmatpush1.bf16.msra.mxu0 %v2037
    %2067 = vmatprep.subr.bf16.mxu0 0
    %2068 = vmatpush1.bf16.msra.mxu0 %v2036
    %2069 = vmatprep.subr.bf16.mxu0 0
    %2070 = vmatpush1.bf16.msra.mxu0 %v2035
    %2071 = vmatprep.subr.bf16.mxu0 0
    %2072 = vmatpush1.bf16.msra.mxu0 %v2034
    %2073 = vmatprep.subr.bf16.mxu0 0
    %2074 = vmatpush1.bf16.msra.mxu0 %v2033
    %2075 = vmatprep.subr.bf16.mxu0 0
    %2076 = vmatpush1.bf16.msra.mxu0 %v2032
    %2077 = vmatprep.subr.bf16.mxu0 0
    %2078 = vmatpush1.bf16.msra.mxu0 %v2031
    %2079 = vmatprep.subr.bf16.mxu0 0
    %2080 = vmatpush2.bf16.msra.mxu0 %v2046
    %2081 = vmatprep.subr.bf16.mxu0 0
    %2082 = vmatpush2.bf16.msra.mxu0 %v2045
    %2083 = vmatprep.subr.bf16.mxu0 0
    %2084 = vmatpush2.bf16.msra.mxu0 %v2044
    %2085 = vmatprep.subr.bf16.mxu0 0
    %2086 = vmatpush2.bf16.msra.mxu0 %v2043
    %2087 = vmatprep.subr.bf16.mxu0 0
    %2088 = vmatpush2.bf16.msra.mxu0 %v2042
    %2089 = vmatprep.subr.bf16.mxu0 0
    %2090 = vmatpush2.bf16.msra.mxu0 %v2041
    %2091 = vmatprep.subr.bf16.mxu0 0
    %2092 = vmatpush2.bf16.msra.mxu0 %v2040
    %2093 = vmatprep.subr.bf16.mxu0 0
    %2094 = vmatpush2.bf16.msra.mxu0 %v2039
    %2095 = vmatprep.mubr.bf16.mxu0 %v1934
    %2096 = vmatmul.mubr.bf16.gmra.mxu0 %v1933
    %v2097 = vpop.f32.mrf.mxu0
    %v2098 = vadd.f32 0.0, %v2097
    %v2099 = vpop.f32.mrf.mxu0
    %v2100 = vpop.f32.mrf.mxu0
    %v2101 = vpop.f32.mrf.mxu0
    %2102 = vdwg.mxu0
    %v2103 = vmul.f32 %v1353, %v1917
    %v2104 = vmul.f32 %v1355, %v1918
    %v2105 = vsub.f32 %v2103, %v2104
    %v2106 = vmul.f32 %v1355, %v1917
    %v2107 = vmul.f32 %v1353, %v1918
    %v2108 = vadd.f32 %v2106, %v2107
    %v2109 = vmul.f32 %v1553, %v2105
    %v2110 = vmul.f32 %v1554, %v2108
    %v2111 = vsub.f32 %v2109, %v2110
    %v2112 = vmul.f32 %v1554, %v2105
    %v2113 = vmul.f32 %v1553, %v2108
    %v2114 = vadd.f32 %v2112, %v2113
    %v2115 = vpack.c.bf16 %v2111, %v2111
    %v2116 = vpack.c.bf16 %v2114, %v2114
    %v2117 = vld [vmem:[#allocation15] sm:$0xff]
    %v2118 = vld [vmem:[#allocation15 + $0x8] sm:$0xff]
    %v2119 = vld [vmem:[#allocation15 + $0x10] sm:$0xff]
    %v2120 = vld [vmem:[#allocation15 + $0x18] sm:$0xff]
    %v2121 = vld [vmem:[#allocation15 + $0x20] sm:$0xff]
    %v2122 = vld [vmem:[#allocation15 + $0x28] sm:$0xff]
    %v2123 = vld [vmem:[#allocation15 + $0x30] sm:$0xff]
    %v2124 = vld [vmem:[#allocation15 + $0x38] sm:$0xff]
    %v2125 = vld [vmem:[#allocation15 + $0x40] sm:$0xff]
    %v2126 = vld [vmem:[#allocation15 + $0x48] sm:$0xff]
    %v2127 = vld [vmem:[#allocation15 + $0x50] sm:$0xff]
    %v2128 = vld [vmem:[#allocation15 + $0x58] sm:$0xff]
    %v2129 = vld [vmem:[#allocation15 + $0x60] sm:$0xff]
    %v2130 = vld [vmem:[#allocation15 + $0x68] sm:$0xff]
    %v2131 = vld [vmem:[#allocation15 + $0x70] sm:$0xff]
    %v2132 = vld [vmem:[#allocation15 + $0x78] sm:$0xff]
    %v2133 = vld [vmem:[#allocation15 + $0x80] sm:$0xff]
    %v2134 = vld [vmem:[#allocation15 + $0x88] sm:$0xff]
    %v2135 = vld [vmem:[#allocation15 + $0x90] sm:$0xff]
    %v2136 = vld [vmem:[#allocation15 + $0x98] sm:$0xff]
    %v2137 = vld [vmem:[#allocation15 + $0xa0] sm:$0xff]
    %v2138 = vld [vmem:[#allocation15 + $0xa8] sm:$0xff]
    %v2139 = vld [vmem:[#allocation15 + $0xb0] sm:$0xff]
    %v2140 = vld [vmem:[#allocation15 + $0xb8] sm:$0xff]
    %v2141 = vld [vmem:[#allocation15 + $0xc0] sm:$0xff]
    %v2142 = vld [vmem:[#allocation15 + $0xc8] sm:$0xff]
    %v2143 = vld [vmem:[#allocation15 + $0xd0] sm:$0xff]
    %v2144 = vld [vmem:[#allocation15 + $0xd8] sm:$0xff]
    %v2145 = vld [vmem:[#allocation15 + $0xe0] sm:$0xff]
    %v2146 = vld [vmem:[#allocation15 + $0xe8] sm:$0xff]
    %v2147 = vld [vmem:[#allocation15 + $0xf0] sm:$0xff]
    %v2148 = vld [vmem:[#allocation15 + $0xf8] sm:$0xff]
    %v2181 = vunpack.c.l.b16 %v2117
    %v2182 = vunpack.c.h.b16 %v2117
    %v2183 = vunpack.c.l.b16 %v2118
    %v2184 = vunpack.c.h.b16 %v2118
    %v2185 = vunpack.c.l.b16 %v2119
    %v2186 = vunpack.c.h.b16 %v2119
    %v2187 = vunpack.c.l.b16 %v2120
    %v2188 = vunpack.c.h.b16 %v2120
    %v2189 = vunpack.c.l.b16 %v2121
    %v2190 = vunpack.c.h.b16 %v2121
    %v2191 = vunpack.c.l.b16 %v2122
    %v2192 = vunpack.c.h.b16 %v2122
    %v2193 = vunpack.c.l.b16 %v2123
    %v2194 = vunpack.c.h.b16 %v2123
    %v2195 = vunpack.c.l.b16 %v2124
    %v2196 = vunpack.c.h.b16 %v2124
    %v2197 = vunpack.c.l.b16 %v2125
    %v2198 = vunpack.c.h.b16 %v2125
    %v2199 = vunpack.c.l.b16 %v2126
    %v2200 = vunpack.c.h.b16 %v2126
    %v2201 = vunpack.c.l.b16 %v2127
    %v2202 = vunpack.c.h.b16 %v2127
    %v2203 = vunpack.c.l.b16 %v2128
    %v2204 = vunpack.c.h.b16 %v2128
    %v2205 = vunpack.c.l.b16 %v2129
    %v2206 = vunpack.c.h.b16 %v2129
    %v2207 = vunpack.c.l.b16 %v2130
    %v2208 = vunpack.c.h.b16 %v2130
    %v2209 = vunpack.c.l.b16 %v2131
    %v2210 = vunpack.c.h.b16 %v2131
    %v2211 = vunpack.c.l.b16 %v2132
    %v2212 = vunpack.c.h.b16 %v2132
    %v2213 = vunpack.c.l.b16 %v2133
    %v2214 = vunpack.c.h.b16 %v2133
    %v2215 = vunpack.c.l.b16 %v2134
    %v2216 = vunpack.c.h.b16 %v2134
    %v2217 = vunpack.c.l.b16 %v2135
    %v2218 = vunpack.c.h.b16 %v2135
    %v2219 = vunpack.c.l.b16 %v2136
    %v2220 = vunpack.c.h.b16 %v2136
    %v2221 = vunpack.c.l.b16 %v2137
    %v2222 = vunpack.c.h.b16 %v2137
    %v2223 = vunpack.c.l.b16 %v2138
    %v2224 = vunpack.c.h.b16 %v2138
    %v2225 = vunpack.c.l.b16 %v2139
    %v2226 = vunpack.c.h.b16 %v2139
    %v2227 = vunpack.c.l.b16 %v2140
    %v2228 = vunpack.c.h.b16 %v2140
    %v2229 = vunpack.c.l.b16 %v2141
    %v2230 = vunpack.c.h.b16 %v2141
    %v2231 = vunpack.c.l.b16 %v2142
    %v2232 = vunpack.c.h.b16 %v2142
    %v2233 = vunpack.c.l.b16 %v2143
    %v2234 = vunpack.c.h.b16 %v2143
    %v2235 = vunpack.c.l.b16 %v2144
    %v2236 = vunpack.c.h.b16 %v2144
    %v2237 = vunpack.c.l.b16 %v2145
    %v2238 = vunpack.c.h.b16 %v2145
    %v2239 = vunpack.c.l.b16 %v2146
    %v2240 = vunpack.c.h.b16 %v2146
    %v2241 = vunpack.c.l.b16 %v2147
    %v2242 = vunpack.c.h.b16 %v2147
    %v2243 = vunpack.c.l.b16 %v2148
    %v2244 = vunpack.c.h.b16 %v2148
    %v2245 = vpack.c.b16 %v2183, %v2181
    %v2246 = vpack.c.b16 %v2184, %v2182
    %v2247 = vpack.c.b16 %v2187, %v2185
    %v2248 = vpack.c.b16 %v2188, %v2186
    %v2249 = vpack.c.b16 %v2191, %v2189
    %v2250 = vpack.c.b16 %v2192, %v2190
    %v2251 = vpack.c.b16 %v2195, %v2193
    %v2252 = vpack.c.b16 %v2196, %v2194
    %v2253 = vpack.c.b16 %v2199, %v2197
    %v2254 = vpack.c.b16 %v2200, %v2198
    %v2255 = vpack.c.b16 %v2203, %v2201
    %v2256 = vpack.c.b16 %v2204, %v2202
    %v2257 = vpack.c.b16 %v2207, %v2205
    %v2258 = vpack.c.b16 %v2208, %v2206
    %v2259 = vpack.c.b16 %v2211, %v2209
    %v2260 = vpack.c.b16 %v2212, %v2210
    %v2261 = vpack.c.b16 %v2215, %v2213
    %v2262 = vpack.c.b16 %v2216, %v2214
    %v2263 = vpack.c.b16 %v2219, %v2217
    %v2264 = vpack.c.b16 %v2220, %v2218
    %v2265 = vpack.c.b16 %v2223, %v2221
    %v2266 = vpack.c.b16 %v2224, %v2222
    %v2267 = vpack.c.b16 %v2227, %v2225
    %v2268 = vpack.c.b16 %v2228, %v2226
    %v2269 = vpack.c.b16 %v2231, %v2229
    %v2270 = vpack.c.b16 %v2232, %v2230
    %v2271 = vpack.c.b16 %v2235, %v2233
    %v2272 = vpack.c.b16 %v2236, %v2234
    %v2273 = vpack.c.b16 %v2239, %v2237
    %v2274 = vpack.c.b16 %v2240, %v2238
    %v2275 = vpack.c.b16 %v2243, %v2241
    %v2276 = vpack.c.b16 %v2244, %v2242
    %2309 = vmatprep.subr.bf16.mxu0 %v2260
    %2310 = vmatpush1.bf16.msra.mxu0 %v2259
    %2311 = vmatprep.subr.bf16.mxu0 %v2258
    %2312 = vmatpush1.bf16.msra.mxu0 %v2257
    %2313 = vmatprep.subr.bf16.mxu0 %v2256
    %2314 = vmatpush1.bf16.msra.mxu0 %v2255
    %2315 = vmatprep.subr.bf16.mxu0 %v2254
    %2316 = vmatpush1.bf16.msra.mxu0 %v2253
    %2317 = vmatprep.subr.bf16.mxu0 %v2252
    %2318 = vmatpush1.bf16.msra.mxu0 %v2251
    %2319 = vmatprep.subr.bf16.mxu0 %v2250
    %2320 = vmatpush1.bf16.msra.mxu0 %v2249
    %2321 = vmatprep.subr.bf16.mxu0 %v2248
    %2322 = vmatpush1.bf16.msra.mxu0 %v2247
    %2323 = vmatprep.subr.bf16.mxu0 %v2246
    %2324 = vmatpush1.bf16.msra.mxu0 %v2245
    %2325 = vmatprep.subr.bf16.mxu0 %v2276
    %2326 = vmatpush2.bf16.msra.mxu0 %v2275
    %2327 = vmatprep.subr.bf16.mxu0 %v2274
    %2328 = vmatpush2.bf16.msra.mxu0 %v2273
    %2329 = vmatprep.subr.bf16.mxu0 %v2272
    %2330 = vmatpush2.bf16.msra.mxu0 %v2271
    %2331 = vmatprep.subr.bf16.mxu0 %v2270
    %2332 = vmatpush2.bf16.msra.mxu0 %v2269
    %2333 = vmatprep.subr.bf16.mxu0 %v2268
    %2334 = vmatpush2.bf16.msra.mxu0 %v2267
    %2335 = vmatprep.subr.bf16.mxu0 %v2266
    %2336 = vmatpush2.bf16.msra.mxu0 %v2265
    %2337 = vmatprep.subr.bf16.mxu0 %v2264
    %2338 = vmatpush2.bf16.msra.mxu0 %v2263
    %2339 = vmatprep.subr.bf16.mxu0 %v2262
    %2340 = vmatpush2.bf16.msra.mxu0 %v2261
    %2341 = vmatprep.mubr.bf16.mxu0 %v2116
    %2342 = vmatmul.mubr.bf16.gmra.mxu0 %v2115
    %v2343 = vpop.f32.mrf.mxu0
    %v2344 = vadd.f32 0.0, %v2343
    %v2345 = vpop.f32.mrf.mxu0
    %v2346 = vadd.f32 0.0, %v2345
    %v2347 = vpop.f32.mrf.mxu0
    %v2348 = vpop.f32.mrf.mxu0
    %2349 = vdwg.mxu0
    %2350 = vst [vmem:[#allocation18] sm:$0xff] %v2344
    %2351 = vst [vmem:[#allocation18 + $0x8] sm:$0xff] %v2346
    %2352 = vst [vmem:[#allocation18 + $0x10] sm:$0xff] %v2098
    // Predicated region
    $region70: #{qa_baseline_forward.1} parent=1 // pred_check
      _
    $region71: #{qa_baseline_forward.1} parent=1 // pred_check_branch
      %2354 = sbr.rel (0) target = $region73
    $region72: #{qa_baseline_forward.1} parent=1 // pred_region
      %s2356 = ssub.s32 384, 384
      %2357 = vsyncadd [#allocation8], %s2356
      %s2359 = sshll.u32 [#allocation18], 4
      %s2360 = int_to_ptr.vmem [resolvable:$true] %s2359
      %2362 = dma.vmem_to_hbm [thread:$0]  %s2360, 384, %s13, [#allocation8]
    $region73: #{qa_baseline_forward.1} parent=1 // pred_fallthru
      _
    // Predicated region
    $region74: #{qa_baseline_forward.1} parent=1 // pred_check
      _
    $region75: #{qa_baseline_forward.1} parent=1 // pred_check_branch
      %2364 = sbr.rel (0) target = $region77
    $region76: #{qa_baseline_forward.1} parent=1 // pred_region
      %2365 = dma.done [#allocation8], 384
    $region77: #{qa_baseline_forward.1} parent=1 // pred_fallthru
      _
    %2366 = vsyncpa [#allocation7], 1
    %2367 = vsyncpa [#allocation10], 1
    %2368 = vsyncpa [#allocation13], 1
    %2369 = vsyncpa [#allocation16], 1
    %2370 = vsyncpa [#allocation8], 1

</llo_original>
